<compile_context>
chip_gen: v5e
topology: v5e:2x2
jax: 0.10.0
libtpu: 0.0.40
codegen_flags: <defaults>
</compile_context>

<pallas_src>
import jax
import jax.numpy as jnp
from jax.experimental import pallas as pl
from jax.experimental.pallas import tpu as pltpu

LN_EPS = 1e-5        # PyTorch nn.LayerNorm default eps (affine = identity here)

FC1_DIM = 400        # true hidden dims (LayerNorm divisors)
FC2_DIM = 300
FC1_PAD = 512        # lane-aligned padded dims (multiples of 128)
FC2_PAD = 384        # 3 * 128 — keep at 384 (do NOT pad to 512)
FUSED_PAD = FC1_PAD + FC2_PAD   # fused fc1 + a_layer output width (896)
OUT_LANES = 128      # lane-dense q output slab width


def _round_up(x, m):
    return ((x + m - 1) // m) * m


def _layernorm_1pass(x, n_true):
    # Single-pass stats: padded feature columns entering LN are exactly zero,
    # so summing the padded width equals summing the true width; divide by the
    # TRUE feature count.
    inv_n = 1.0 / float(n_true)
    s1 = jnp.sum(x, axis=-1, keepdims=True)
    s2 = jnp.sum(x * x, axis=-1, keepdims=True)
    mu = s1 * inv_n
    var = jnp.maximum(s2 * inv_n - mu * mu, 0.0)
    return (x - mu) * jax.lax.rsqrt(var + LN_EPS)


def critic_kernel(x_ref,
                  win_ref, bin_ref,
                  w2_ref, b2_ref,
                  wq_ref, bq_ref,
                  q_ref):
    # bf16 operands on the MXU, f32 accumulation, f32 LN/ReLU.
    x = x_ref[...].astype(jnp.bfloat16)          # [tb, obs_dim + act_dim]

    # Fused fc1 + a_layer: one MXU matmul against the block-diagonal weight.
    fused = jnp.dot(x, win_ref[...], preferred_element_type=jnp.float32) + bin_ref[...]
    h1_pre = fused[:, :FC1_PAD]                  # fc1(state)   (lane-aligned slice)
    a = fused[:, FC1_PAD:]                       # a_layer(action)

    # LayerNorm(400) -> relu
    h1 = jnp.maximum(_layernorm_1pass(h1_pre, FC1_DIM), 0.0)

    # fc2 -> LayerNorm(300) -> relu
    h2 = jnp.dot(h1.astype(jnp.bfloat16), w2_ref[...],
                 preferred_element_type=jnp.float32) + b2_ref[...]
    h2 = jnp.maximum(_layernorm_1pass(h2, FC2_DIM), 0.0)

    # fuse + relu; q head as an MXU matmul against the lane-replicated wq
    # (rows 300:384 are zero, so nonzero padded sa columns cannot leak in).
    sa = jnp.maximum(a + h2, 0.0)
    q = jnp.dot(sa.astype(jnp.bfloat16), wq_ref[...],
                preferred_element_type=jnp.float32) + bq_ref[...]

    # Lane-dense store: every column of the [tb, 128] slab equals q.
    q_ref[...] = q.astype(q_ref.dtype)


def critic_forward(state, action, packed_params, *, batch_tile=512):
    """state: [B, obs_dim] f32, action: [B, n_action] f32  ->  q: [B, 1] f32."""
    B, obs_dim = state.shape
    act_dim = action.shape[1]
    in_dim = obs_dim + act_dim
    win, bin_, w2p, b2p, wqp, bq = packed_params

    # Concatenated input for the fused fc1 + a_layer matmul.
    x = jnp.concatenate([state, action], axis=1)

    # >= 2 grid steps (even) so the 'parallel' batch axis shards across v7x's
    # two TensorCores; tile chosen to minimise zero-row padding.
    n_steps = max(2, int(pl.cdiv(B, batch_tile)))
    if n_steps > 2 and n_steps % 2:
        n_steps += 1
    tb = _round_up(int(pl.cdiv(B, n_steps)), 8)   # sublane-aligned batch tile
    Bp = tb * n_steps
    if Bp != B:
        x = jnp.pad(x, ((0, Bp - B), (0, 0)))

    def resident(arr):
        # Constant block index across the batch grid -> stays in VMEM.
        return pl.BlockSpec(arr.shape, lambda i: (0,) * arr.ndim)

    flops = 2 * Bp * (in_dim * FUSED_PAD + FC1_PAD * FC2_PAD + FC2_PAD * OUT_LANES)
    bytes_accessed = int(
        sum(int(p.size) * p.dtype.itemsize for p in packed_params)
        + Bp * in_dim * 4                 # input read
        + Bp * OUT_LANES * 4              # real lane-dense output writeback
    )
    cost = pl.CostEstimate(flops=int(flops), transcendentals=int(2 * Bp),
                           bytes_accessed=bytes_accessed)

    q_slab = pl.pallas_call(
        critic_kernel,
        out_shape=jax.ShapeDtypeStruct((Bp, OUT_LANES), jnp.float32),
        grid=(n_steps,),
        in_specs=[
            pl.BlockSpec((tb, in_dim), lambda i: (i, 0)),
            resident(win), resident(bin_),
            resident(w2p), resident(b2p),
            resident(wqp), resident(bq),
        ],
        out_specs=pl.BlockSpec((tb, OUT_LANES), lambda i: (i, 0)),
        compiler_params=pltpu.CompilerParams(
            dimension_semantics=("parallel",)),   # shards batch across v7x's 2 TCs
        cost_estimate=cost,
    )(x, win, bin_, w2p, b2p, wqp, bq)

    return q_slab[:B, 0:1]


def init_params(key, obs_dim, n_action, fc1dim=FC1_DIM, fc2dim=FC2_DIM):
    """Deterministic init mirroring CriticNetwork.__init__ (weights stored [in, out])."""
    k = jax.random.split(key, 8)
    f_in = 1.0 / jnp.sqrt(float(obs_dim))
    f_in2 = 1.0 / jnp.sqrt(float(fc1dim))

    w1 = jax.random.uniform(k[0], (obs_dim, fc1dim), jnp.float32, -f_in, f_in)
    b1 = jnp.full((1, fc1dim), f_in, dtype=jnp.float32)   # uniform_(f_in, f_in) quirk
    w2 = jax.random.uniform(k[1], (fc1dim, fc2dim), jnp.float32, -f_in2, f_in2)
    b2 = jax.random.uniform(k[2], (1, fc2dim), jnp.float32, -f_in2, f_in2)
    wa = jax.random.uniform(k[3], (n_action, fc2dim), jnp.float32, -0.003, 0.003)
    ba = jax.random.uniform(k[4], (1, fc2dim), jnp.float32, -0.003, 0.003)
    wq = jax.random.uniform(k[5], (fc2dim, 1), jnp.float32, -0.003, 0.003)
    bq = jax.random.uniform(k[6], (1, 1), jnp.float32, -0.003, 0.003)
    return (w1, b1, w2, b2, wa, ba, wq, bq)


def pack_params(params):
    """bf16 weights, zero-padded / block-diagonal packing for the fused kernel."""
    w1, b1, w2, b2, wa, ba, wq, bq = params
    obs_dim = w1.shape[0]
    n_action = wa.shape[0]
    in_dim = obs_dim + n_action

    # Block-diagonal [fc1 | a_layer] weight + bias for the fused first matmul.
    win = jnp.zeros((in_dim, FUSED_PAD), jnp.bfloat16)
    win = win.at[:obs_dim, :FC1_DIM].set(w1.astype(jnp.bfloat16))
    win = win.at[obs_dim:, FC1_PAD:FC1_PAD + FC2_DIM].set(wa.astype(jnp.bfloat16))
    bin_ = jnp.zeros((1, FUSED_PAD), jnp.float32)
    bin_ = bin_.at[:, :FC1_DIM].set(b1)
    bin_ = bin_.at[:, FC1_PAD:FC1_PAD + FC2_DIM].set(ba)

    # fc2: zero rows 400:512 and zero cols 300:384 keep padded activations out.
    w2p = jnp.zeros((FC1_PAD, FC2_PAD), jnp.bfloat16).at[:FC1_DIM, :FC2_DIM].set(
        w2.astype(jnp.bfloat16))
    b2p = jnp.zeros((1, FC2_PAD), jnp.float32).at[:, :FC2_DIM].set(b2)

    # q head as an MXU weight: wq replicated across the 128 output lanes,
    # padded rows 300:384 zero.
    wqp = jnp.zeros((FC2_PAD, OUT_LANES), jnp.bfloat16).at[:FC2_DIM, :].set(
        jnp.broadcast_to(wq.astype(jnp.bfloat16), (FC2_DIM, OUT_LANES)))
    return (win, bin_, w2p, b2p, wqp, bq)


def critic_reference(state, action, params):
    """Pure-JAX reference mirroring the kernel's bf16-weight / f32-accumulate math."""
    w1, b1, w2, b2, wa, ba, wq, bq = params
    w1b, w2b, wab, wqb = (w.astype(jnp.bfloat16) for w in (w1, w2, wa, wq))

    def ln(x):
        mu = jnp.mean(x, axis=-1, keepdims=True)
        var = jnp.mean((x - mu) ** 2, axis=-1, keepdims=True)
        return (x - mu) / jnp.sqrt(var + LN_EPS)

    s = state.astype(jnp.bfloat16)
    a_in = action.astype(jnp.bfloat16)
    h1 = jnp.dot(s, w1b, preferred_element_type=jnp.float32) + b1
    h1 = jnp.maximum(ln(h1), 0.0)
    h2 = jnp.dot(h1.astype(jnp.bfloat16), w2b, preferred_element_type=jnp.float32) + b2
    h2 = jnp.maximum(ln(h2), 0.0)
    a = jnp.dot(a_in, wab, preferred_element_type=jnp.float32) + ba
    sa = jnp.maximum(a + h2, 0.0)
    return jnp.dot(sa.astype(jnp.bfloat16), wqb,
                   preferred_element_type=jnp.float32) + bq


if __name__ == "__main__":
    key = jax.random.PRNGKey(0)
    k_state, k_action, k_params = jax.random.split(key, 3)

    B, obs_dim, n_action = 8, 16, 4

    state = jax.random.normal(k_state, (B, obs_dim), dtype=jnp.float32)
    action = jax.random.normal(k_action, (B, n_action), dtype=jnp.float32)
    params = init_params(k_params, obs_dim, n_action)
    packed = pack_params(params)

    # TODO(synk): for per-step RL inference (tiny B), keep the packed weights
    # resident across calls (cross-pallas_call prefetch) or fuse multiple
    # critic evals (online+target critics, or actor+critic) into one
    # pallas_call — at B~8 dispatch + weight DMA dominates, not the math.
    q = critic_forward(state, action, packed)
    q = jax.block_until_ready(q)

    q_ref = critic_reference(state, action, params)
    assert q.shape == (B, 1)
    assert jnp.allclose(q, q_ref, atol=5e-4, rtol=1e-3), (q, q_ref)

    print("KERNEL_OK")
</pallas_src>

<mosaic_0001>
module attributes {stable_mosaic.version = 11 : i64} {
  func.func @critic_kernel(%arg0: i32, %arg1: memref<8x20xf32, #tpu.memory_space<vmem>>, %arg2: memref<20x896xbf16, #tpu.memory_space<vmem>>, %arg3: memref<1x896xf32, #tpu.memory_space<vmem>>, %arg4: memref<512x384xbf16, #tpu.memory_space<vmem>>, %arg5: memref<1x384xf32, #tpu.memory_space<vmem>>, %arg6: memref<384x128xbf16, #tpu.memory_space<vmem>>, %arg7: memref<1x1xf32, #tpu.memory_space<vmem>>, %arg8: memref<8x128xf32, #tpu.memory_space<vmem>>) attributes {dimension_semantics = [#tpu.dimension_semantics<parallel>], iteration_bounds = array<i64: 2>, scalar_prefetch = 0 : i64, scratch_operands = 0 : i64, tpu.core_type = #tpu.core_type<tc>, window_params = [{transform_indices = @transform_0, window_bounds = array<i64: 8, 20>}, {pipeline_mode = #tpu.pipeline_mode<synchronous>, transform_indices = @transform_1, window_bounds = array<i64: 20, 896>}, {pipeline_mode = #tpu.pipeline_mode<synchronous>, transform_indices = @transform_2, window_bounds = array<i64: 1, 896>}, {pipeline_mode = #tpu.pipeline_mode<synchronous>, transform_indices = @transform_3, window_bounds = array<i64: 512, 384>}, {pipeline_mode = #tpu.pipeline_mode<synchronous>, transform_indices = @transform_4, window_bounds = array<i64: 1, 384>}, {pipeline_mode = #tpu.pipeline_mode<synchronous>, transform_indices = @transform_5, window_bounds = array<i64: 384, 128>}, {pipeline_mode = #tpu.pipeline_mode<synchronous>, transform_indices = @transform_6, window_bounds = array<i64: 1, 1>}, {transform_indices = @transform_7, window_bounds = array<i64: 8, 128>}]} {
    %c0 = arith.constant 0 : index
    %c0_0 = arith.constant 0 : index
    %0 = vector.load %arg1[%c0, %c0_0] : memref<8x20xf32, #tpu.memory_space<vmem>>, vector<8x20xf32>
    %1 = arith.truncf %0 : vector<8x20xf32> to vector<8x20xbf16>
    %c0_1 = arith.constant 0 : index
    %c0_2 = arith.constant 0 : index
    %2 = vector.load %arg2[%c0_1, %c0_2] : memref<20x896xbf16, #tpu.memory_space<vmem>>, vector<20x896xbf16>
    %cst = arith.constant dense<0.000000e+00> : vector<8x896xf32>
    %3 = tpu.matmul %1, %2, %cst {dimension_numbers = #tpu.dot_dimension_numbers<[1], [0], [0], [1], [0, 0, 1, 1], [], []>} : vector<8x20xbf16>, vector<20x896xbf16>, vector<8x896xf32> -> vector<8x896xf32>
    %c0_3 = arith.constant 0 : index
    %c0_4 = arith.constant 0 : index
    %4 = vector.load %arg3[%c0_3, %c0_4] : memref<1x896xf32, #tpu.memory_space<vmem>>, vector<1x896xf32>
    %5 = vector.broadcast %4 : vector<1x896xf32> to vector<8x896xf32>
    %6 = arith.addf %3, %5 : vector<8x896xf32>
    %7 = vector.extract_strided_slice %6 {offsets = [0, 0], sizes = [8, 512], strides = [1, 1]} : vector<8x896xf32> to vector<8x512xf32>
    %8 = vector.extract_strided_slice %6 {offsets = [0, 512], sizes = [8, 384], strides = [1, 1]} : vector<8x896xf32> to vector<8x384xf32>
    %cst_5 = arith.constant dense<0.000000e+00> : vector<8xf32>
    %9 = vector.multi_reduction <add>, %7, %cst_5 [1] : vector<8x512xf32> to vector<8xf32>
    %10 = vector.shape_cast %9 : vector<8xf32> to vector<8x1xf32>
    %11 = arith.mulf %7, %7 : vector<8x512xf32>
    %cst_6 = arith.constant dense<0.000000e+00> : vector<8xf32>
    %12 = vector.multi_reduction <add>, %11, %cst_6 [1] : vector<8x512xf32> to vector<8xf32>
    %13 = vector.shape_cast %12 : vector<8xf32> to vector<8x1xf32>
    %cst_7 = arith.constant 2.500000e-03 : f32
    %14 = vector.broadcast %cst_7 : f32 to vector<8x1xf32>
    %15 = arith.mulf %10, %14 : vector<8x1xf32>
    %cst_8 = arith.constant 2.500000e-03 : f32
    %16 = vector.broadcast %cst_8 : f32 to vector<8x1xf32>
    %17 = arith.mulf %13, %16 : vector<8x1xf32>
    %18 = arith.mulf %15, %15 : vector<8x1xf32>
    %19 = arith.subf %17, %18 : vector<8x1xf32>
    %cst_9 = arith.constant 0.000000e+00 : f32
    %20 = vector.broadcast %cst_9 : f32 to vector<8x1xf32>
    %21 = arith.maximumf %19, %20 : vector<8x1xf32>
    %22 = vector.broadcast %15 : vector<8x1xf32> to vector<8x512xf32>
    %23 = arith.subf %7, %22 : vector<8x512xf32>
    %cst_10 = arith.constant 9.99999974E-6 : f32
    %24 = vector.broadcast %cst_10 : f32 to vector<8x1xf32>
    %25 = arith.addf %21, %24 : vector<8x1xf32>
    %26 = math.rsqrt %25 : vector<8x1xf32>
    %27 = vector.broadcast %26 : vector<8x1xf32> to vector<8x512xf32>
    %28 = arith.mulf %23, %27 : vector<8x512xf32>
    %cst_11 = arith.constant 0.000000e+00 : f32
    %29 = vector.broadcast %cst_11 : f32 to vector<8x512xf32>
    %30 = arith.maximumf %28, %29 : vector<8x512xf32>
    %31 = arith.truncf %30 : vector<8x512xf32> to vector<8x512xbf16>
    %c0_12 = arith.constant 0 : index
    %c0_13 = arith.constant 0 : index
    %32 = vector.load %arg4[%c0_12, %c0_13] : memref<512x384xbf16, #tpu.memory_space<vmem>>, vector<512x384xbf16>
    %cst_14 = arith.constant dense<0.000000e+00> : vector<8x384xf32>
    %33 = tpu.matmul %31, %32, %cst_14 {dimension_numbers = #tpu.dot_dimension_numbers<[1], [0], [0], [1], [0, 0, 1, 1], [], []>} : vector<8x512xbf16>, vector<512x384xbf16>, vector<8x384xf32> -> vector<8x384xf32>
    %c0_15 = arith.constant 0 : index
    %c0_16 = arith.constant 0 : index
    %34 = vector.load %arg5[%c0_15, %c0_16] : memref<1x384xf32, #tpu.memory_space<vmem>>, vector<1x384xf32>
    %35 = vector.broadcast %34 : vector<1x384xf32> to vector<8x384xf32>
    %36 = arith.addf %33, %35 : vector<8x384xf32>
    %cst_17 = arith.constant dense<0.000000e+00> : vector<8xf32>
    %37 = vector.multi_reduction <add>, %36, %cst_17 [1] : vector<8x384xf32> to vector<8xf32>
    %38 = vector.shape_cast %37 : vector<8xf32> to vector<8x1xf32>
    %39 = arith.mulf %36, %36 : vector<8x384xf32>
    %cst_18 = arith.constant dense<0.000000e+00> : vector<8xf32>
    %40 = vector.multi_reduction <add>, %39, %cst_18 [1] : vector<8x384xf32> to vector<8xf32>
    %41 = vector.shape_cast %40 : vector<8xf32> to vector<8x1xf32>
    %cst_19 = arith.constant 0.00333333341 : f32
    %42 = vector.broadcast %cst_19 : f32 to vector<8x1xf32>
    %43 = arith.mulf %38, %42 : vector<8x1xf32>
    %cst_20 = arith.constant 0.00333333341 : f32
    %44 = vector.broadcast %cst_20 : f32 to vector<8x1xf32>
    %45 = arith.mulf %41, %44 : vector<8x1xf32>
    %46 = arith.mulf %43, %43 : vector<8x1xf32>
    %47 = arith.subf %45, %46 : vector<8x1xf32>
    %cst_21 = arith.constant 0.000000e+00 : f32
    %48 = vector.broadcast %cst_21 : f32 to vector<8x1xf32>
    %49 = arith.maximumf %47, %48 : vector<8x1xf32>
    %50 = vector.broadcast %43 : vector<8x1xf32> to vector<8x384xf32>
    %51 = arith.subf %36, %50 : vector<8x384xf32>
    %cst_22 = arith.constant 9.99999974E-6 : f32
    %52 = vector.broadcast %cst_22 : f32 to vector<8x1xf32>
    %53 = arith.addf %49, %52 : vector<8x1xf32>
    %54 = math.rsqrt %53 : vector<8x1xf32>
    %55 = vector.broadcast %54 : vector<8x1xf32> to vector<8x384xf32>
    %56 = arith.mulf %51, %55 : vector<8x384xf32>
    %cst_23 = arith.constant 0.000000e+00 : f32
    %57 = vector.broadcast %cst_23 : f32 to vector<8x384xf32>
    %58 = arith.maximumf %56, %57 : vector<8x384xf32>
    %59 = arith.addf %8, %58 : vector<8x384xf32>
    %cst_24 = arith.constant 0.000000e+00 : f32
    %60 = vector.broadcast %cst_24 : f32 to vector<8x384xf32>
    %61 = arith.maximumf %59, %60 : vector<8x384xf32>
    %62 = arith.truncf %61 : vector<8x384xf32> to vector<8x384xbf16>
    %c0_25 = arith.constant 0 : index
    %c0_26 = arith.constant 0 : index
    %63 = vector.load %arg6[%c0_25, %c0_26] : memref<384x128xbf16, #tpu.memory_space<vmem>>, vector<384x128xbf16>
    %cst_27 = arith.constant dense<0.000000e+00> : vector<8x128xf32>
    %64 = tpu.matmul %62, %63, %cst_27 {dimension_numbers = #tpu.dot_dimension_numbers<[1], [0], [0], [1], [0, 0, 1, 1], [], []>} : vector<8x384xbf16>, vector<384x128xbf16>, vector<8x128xf32> -> vector<8x128xf32>
    %c0_28 = arith.constant 0 : index
    %c0_29 = arith.constant 0 : index
    %65 = vector.load %arg7[%c0_28, %c0_29] : memref<1x1xf32, #tpu.memory_space<vmem>>, vector<1x1xf32>
    %66 = vector.broadcast %65 : vector<1x1xf32> to vector<8x128xf32>
    %67 = arith.addf %64, %66 : vector<8x128xf32>
    %c0_30 = arith.constant 0 : index
    %c0_31 = arith.constant 0 : index
    %68 = vector.load %arg8[%c0_30, %c0_31] : memref<8x128xf32, #tpu.memory_space<vmem>>, vector<8x128xf32>
    tpu.vector_store %arg8[%c0_30, %c0_31], %67 {strides = array<i32>} : memref<8x128xf32, #tpu.memory_space<vmem>>, vector<8x128xf32>,
    return
  }
  func.func @transform_0(%arg0: i32) -> (i32, i32) {
    %c0_i32 = arith.constant 0 : i32
    %c0_i32_0 = arith.constant 0 : i32
    return %arg0, %c0_i32 : i32, i32
  }
  func.func @transform_1(%arg0: i32) -> (i32, i32) {
    %c0_i32 = arith.constant 0 : i32
    %c0_i32_0 = arith.constant 0 : i32
    %c0_i32_1 = arith.constant 0 : i32
    return %c0_i32, %c0_i32_0 : i32, i32
  }
  func.func @transform_2(%arg0: i32) -> (i32, i32) {
    %c0_i32 = arith.constant 0 : i32
    %c0_i32_0 = arith.constant 0 : i32
    %c0_i32_1 = arith.constant 0 : i32
    return %c0_i32, %c0_i32_0 : i32, i32
  }
  func.func @transform_3(%arg0: i32) -> (i32, i32) {
    %c0_i32 = arith.constant 0 : i32
    %c0_i32_0 = arith.constant 0 : i32
    %c0_i32_1 = arith.constant 0 : i32
    return %c0_i32, %c0_i32_0 : i32, i32
  }
  func.func @transform_4(%arg0: i32) -> (i32, i32) {
    %c0_i32 = arith.constant 0 : i32
    %c0_i32_0 = arith.constant 0 : i32
    %c0_i32_1 = arith.constant 0 : i32
    return %c0_i32, %c0_i32_0 : i32, i32
  }
  func.func @transform_5(%arg0: i32) -> (i32, i32) {
    %c0_i32 = arith.constant 0 : i32
    %c0_i32_0 = arith.constant 0 : i32
    %c0_i32_1 = arith.constant 0 : i32
    return %c0_i32, %c0_i32_0 : i32, i32
  }
  func.func @transform_6(%arg0: i32) -> (i32, i32) {
    %c0_i32 = arith.constant 0 : i32
    %c0_i32_0 = arith.constant 0 : i32
    %c0_i32_1 = arith.constant 0 : i32
    return %c0_i32, %c0_i32_0 : i32, i32
  }
  func.func @transform_7(%arg0: i32) -> (i32, i32) {
    %c0_i32 = arith.constant 0 : i32
    %c0_i32_0 = arith.constant 0 : i32
    return %arg0, %c0_i32 : i32, i32
  }
}

</mosaic_0001>

<llo_original>
// kernel: tpu_custom_call.1
$region0: #{tpu_custom_call.1}
  #allocation0 [shape = 'u32[]', space=smem, size = 0x4, offset = 0x4, fixed_abs, tag = 'smem constant byte address 0x4 - core index']
  #allocation1 [shape = 'u32[72,128]{1,0:T(1,128)}', space=vmem, size = 0x9000, scoped, tag = 'internal scratch']
  #allocation2 [shape = 'f32[1,1]{1,0:T(1,128)S(1)}', space=vmem, size = 0x200, scoped, tag = 'scoped memory for tpu_custom_call.1']
  %s0 = inlined_call_operand.hbm [shape: f32[16,20], index: 0, kind: input, shape index: {}]
  %s1 = inlined_call_operand.hbm [shape: bf16[20,896], index: 1, kind: input, shape index: {}]
  %s2 = inlined_call_operand.hbm [shape: f32[1,896], index: 2, kind: input, shape index: {}]
  %s3 = inlined_call_operand.hbm [shape: bf16[512,384], index: 3, kind: input, shape index: {}]
  %s4 = inlined_call_operand.vmem [shape: f32[1,384], index: 4, kind: input, shape index: {}]
  %s5 = inlined_call_operand.hbm [shape: bf16[384,128], index: 5, kind: input, shape index: {}]
  %s6 = inlined_call_operand.<no memory space> [shape: f32[1,1], index: 6, kind: input, shape index: {}]
  %s7 = inlined_call_operand.hbm [shape: f32[16,128], index: 7, kind: output, shape index: {}]
  %s8 = sld [smem:[#allocation0]]
  $region81: #{tpu_custom_call.1} parent=0
    _
  %s10 = ssub.s32 1, %s8
  %s11 = scalar_select 0, %s10, %s8
  %v12 = vstv %s6
  %13 = vst [vmem:[#allocation2] sm:$0x1] %v12
  $region1: #{tpu_custom_call.1} parent=0
    #allocation3 [shape = 'u8[8192]{0}', space=vmem, size = 0x2000, scoped, tag = 'input window, operand 0']
    #allocation4 [shape = 's32[2]{0}', space=sflag, size = 0x8, scoped, tag = 'scoped memory for tpu_custom_call.1']
    #allocation5 [shape = 's32[2]{0}', space=sflag, size = 0x8, scoped, tag = 'scoped memory for tpu_custom_call.1']
    #allocation6 [shape = 'u8[43008]{0}', space=vmem, size = 0xa800, scoped, tag = 'input window, operand 1, single buffered']
    #allocation7 [shape = 's32[1]{0}', space=sflag, size = 0x4, scoped, tag = 'scoped memory for tpu_custom_call.1']
    #allocation8 [shape = 'u8[3584]{0}', space=vmem, size = 0x1000, scoped, tag = 'input window, operand 2, single buffered']
    #allocation9 [shape = 'u8[393216]{0}', space=vmem, size = 0x60000, scoped, tag = 'input window, operand 3, single buffered']
    #allocation10 [shape = 's32[1]{0}', space=sflag, size = 0x4, scoped, tag = 'scoped memory for tpu_custom_call.1']
    #allocation11 [shape = 'u8[98304]{0}', space=vmem, size = 0x18000, scoped, tag = 'input window, operand 5, single buffered']
    #allocation12 [shape = 'u8[8192]{0}', space=vmem, size = 0x2000, scoped, tag = 'output window, operand 0']
    %14 = vsyncpa [#allocation4], 0
    %s15 = scalar_lea.sflag [#allocation4], 1
    %16 = vsyncpa %s15, 0
    %17 = vsyncpa [#allocation7], 0
    %18 = vsyncpa [#allocation10], 0
    %19 = vsyncpa [#allocation5], 0
    %s20 = scalar_lea.sflag [#allocation5], 1
    %21 = vsyncpa %s20, 0
    loop: start=0, step=1, limit=4
    $region2: #{tpu_custom_call.1} parent=1 // loop_pre_header
      _
    $region3: #{tpu_custom_call.1} parent=1 // loop_header
      %s23 = sphi 0, %s27
      %p24 = scmp.ge.s32.totalorder %s23, 4
      %s33 = sphi 0, %s35
      %s36 = sphi 0, %s33
      %s37 = sphi 0, %s36
      %s53 = sphi 0, %s37
      %s57 = sphi 0, %s57
      %s59 = sphi 0, %s57
      %s60 = sphi 0, %s59
      %s74 = sphi 0, %s60
      %s78 = sphi 0, %s78
      %s80 = sphi 0, %s78
      %s81 = sphi 0, %s80
      %s95 = sphi 0, %s81
      %s99 = sphi 0, %s99
      %s101 = sphi 0, %s99
      %s102 = sphi 0, %s101
      %s116 = sphi 0, %s102
      %s120 = sphi 0, %s120
      %s122 = sphi 0, %s120
      %s123 = sphi 0, %s122
      %s137 = sphi 0, %s123
      %s141 = sphi 0, %s141
      %s143 = sphi 0, %s141
      %s144 = sphi 0, %s143
      %s158 = sphi 0, %s144
      %s162 = sphi 0, %s162
      %s164 = sphi 0, %s162
      %s165 = sphi 0, %s164
      %s179 = sphi 0, %s165
      %s185 = sphi 0, %s187
      %s188 = sphi 0, %s185
      %s189 = sphi 0, %s188
      %s205 = sphi 0, %s189
    $region4: #{tpu_custom_call.1} parent=1 // loop_header_branch
      %26 = sbr.rel (%p24) target = $region8
    $region5: #{tpu_custom_call.1} parent=1 // loop_body
      %s28 = ssub.s32 %s23, 1
      %s29 = ssub.s32 %s23, 2
      %s30 = sadd.s32 %s23, 1
      %s31 = ssub.s32 %s23, %s30
      %p32 = scmp.eq.s32.totalorder %s31, 0
      %s34 = sadd.s32 %s33, 1
      %s35 = scalar_select %p32, %s33, %s34
      %p38 = pneg %p32
      %p39 = scmp.eq.s32.totalorder %s23, 1
      %p40 = por %p38, %p39
      %p41 = scmp.ne.s32.totalorder %s33, %s36
      %p42 = scmp.eq.s32.totalorder %s23, 0
      %p43 = por %p41, %p42
      %p44 = scmp.ne.s32.totalorder %s33, %s36
      %p45 = scmp.eq.s32.totalorder %s28, 1
      %p46 = por %p44, %p45
      %p47 = scmp.ne.s32.totalorder %s36, %s37
      %p48 = scmp.eq.s32.totalorder %s28, 0
      %p49 = por %p47, %p48
      %p50 = scmp.ne.s32.totalorder %s36, %s37
      %p51 = scmp.eq.s32.totalorder %s29, 1
      %p52 = por %p50, %p51
      %p54 = scmp.ne.s32.totalorder %s37, %s53
      %p55 = scmp.eq.s32.totalorder %s29, 0
      %p56 = por %p54, %p55
      %s58 = sadd.s32 %s57, 1
      %p61 = scmp.eq.s32.totalorder %s23, 1
      %p62 = scmp.ne.s32.totalorder %s57, %s59
      %p63 = scmp.eq.s32.totalorder %s23, 0
      %p64 = por %p62, %p63
      %p65 = scmp.ne.s32.totalorder %s57, %s59
      %p66 = scmp.eq.s32.totalorder %s28, 1
      %p67 = por %p65, %p66
      %p68 = scmp.ne.s32.totalorder %s59, %s60
      %p69 = scmp.eq.s32.totalorder %s28, 0
      %p70 = por %p68, %p69
      %p71 = scmp.ne.s32.totalorder %s59, %s60
      %p72 = scmp.eq.s32.totalorder %s29, 1
      %p73 = por %p71, %p72
      %p75 = scmp.ne.s32.totalorder %s60, %s74
      %p76 = scmp.eq.s32.totalorder %s29, 0
      %p77 = por %p75, %p76
      %s79 = sadd.s32 %s78, 1
      %p82 = scmp.eq.s32.totalorder %s23, 1
      %p83 = scmp.ne.s32.totalorder %s78, %s80
      %p84 = scmp.eq.s32.totalorder %s23, 0
      %p85 = por %p83, %p84
      %p86 = scmp.ne.s32.totalorder %s78, %s80
      %p87 = scmp.eq.s32.totalorder %s28, 1
      %p88 = por %p86, %p87
      %p89 = scmp.ne.s32.totalorder %s80, %s81
      %p90 = scmp.eq.s32.totalorder %s28, 0
      %p91 = por %p89, %p90
      %p92 = scmp.ne.s32.totalorder %s80, %s81
      %p93 = scmp.eq.s32.totalorder %s29, 1
      %p94 = por %p92, %p93
      %p96 = scmp.ne.s32.totalorder %s81, %s95
      %p97 = scmp.eq.s32.totalorder %s29, 0
      %p98 = por %p96, %p97
      %s100 = sadd.s32 %s99, 1
      %p103 = scmp.eq.s32.totalorder %s23, 1
      %p104 = scmp.ne.s32.totalorder %s99, %s101
      %p105 = scmp.eq.s32.totalorder %s23, 0
      %p106 = por %p104, %p105
      %p107 = scmp.ne.s32.totalorder %s99, %s101
      %p108 = scmp.eq.s32.totalorder %s28, 1
      %p109 = por %p107, %p108
      %p110 = scmp.ne.s32.totalorder %s101, %s102
      %p111 = scmp.eq.s32.totalorder %s28, 0
      %p112 = por %p110, %p111
      %p113 = scmp.ne.s32.totalorder %s101, %s102
      %p114 = scmp.eq.s32.totalorder %s29, 1
      %p115 = por %p113, %p114
      %p117 = scmp.ne.s32.totalorder %s102, %s116
      %p118 = scmp.eq.s32.totalorder %s29, 0
      %p119 = por %p117, %p118
      %s121 = sadd.s32 %s120, 1
      %p124 = scmp.eq.s32.totalorder %s23, 1
      %p125 = scmp.ne.s32.totalorder %s120, %s122
      %p126 = scmp.eq.s32.totalorder %s23, 0
      %p127 = por %p125, %p126
      %p128 = scmp.ne.s32.totalorder %s120, %s122
      %p129 = scmp.eq.s32.totalorder %s28, 1
      %p130 = por %p128, %p129
      %p131 = scmp.ne.s32.totalorder %s122, %s123
      %p132 = scmp.eq.s32.totalorder %s28, 0
      %p133 = por %p131, %p132
      %p134 = scmp.ne.s32.totalorder %s122, %s123
      %p135 = scmp.eq.s32.totalorder %s29, 1
      %p136 = por %p134, %p135
      %p138 = scmp.ne.s32.totalorder %s123, %s137
      %p139 = scmp.eq.s32.totalorder %s29, 0
      %p140 = por %p138, %p139
      %s142 = sadd.s32 %s141, 1
      %p145 = scmp.eq.s32.totalorder %s23, 1
      %p146 = scmp.ne.s32.totalorder %s141, %s143
      %p147 = scmp.eq.s32.totalorder %s23, 0
      %p148 = por %p146, %p147
      %p149 = scmp.ne.s32.totalorder %s141, %s143
      %p150 = scmp.eq.s32.totalorder %s28, 1
      %p151 = por %p149, %p150
      %p152 = scmp.ne.s32.totalorder %s143, %s144
      %p153 = scmp.eq.s32.totalorder %s28, 0
      %p154 = por %p152, %p153
      %p155 = scmp.ne.s32.totalorder %s143, %s144
      %p156 = scmp.eq.s32.totalorder %s29, 1
      %p157 = por %p155, %p156
      %p159 = scmp.ne.s32.totalorder %s144, %s158
      %p160 = scmp.eq.s32.totalorder %s29, 0
      %p161 = por %p159, %p160
      %s163 = sadd.s32 %s162, 1
      %p166 = scmp.eq.s32.totalorder %s23, 1
      %p167 = scmp.ne.s32.totalorder %s162, %s164
      %p168 = scmp.eq.s32.totalorder %s23, 0
      %p169 = por %p167, %p168
      %p170 = scmp.ne.s32.totalorder %s162, %s164
      %p171 = scmp.eq.s32.totalorder %s28, 1
      %p172 = por %p170, %p171
      %p173 = scmp.ne.s32.totalorder %s164, %s165
      %p174 = scmp.eq.s32.totalorder %s28, 0
      %p175 = por %p173, %p174
      %p176 = scmp.ne.s32.totalorder %s164, %s165
      %p177 = scmp.eq.s32.totalorder %s29, 1
      %p178 = por %p176, %p177
      %p180 = scmp.ne.s32.totalorder %s165, %s179
      %p181 = scmp.eq.s32.totalorder %s29, 0
      %p182 = por %p180, %p181
      %s183 = ssub.s32 %s23, %s30
      %p184 = scmp.eq.s32.totalorder %s183, 0
      %s186 = sadd.s32 %s185, 1
      %s187 = scalar_select %p184, %s185, %s186
      %p190 = pneg %p184
      %p191 = scmp.eq.s32.totalorder %s23, 1
      %p192 = por %p190, %p191
      %p193 = scmp.ne.s32.totalorder %s185, %s188
      %p194 = scmp.eq.s32.totalorder %s23, 0
      %p195 = por %p193, %p194
      %p196 = scmp.ne.s32.totalorder %s185, %s188
      %p197 = scmp.eq.s32.totalorder %s28, 1
      %p198 = por %p196, %p197
      %p199 = scmp.ne.s32.totalorder %s188, %s189
      %p200 = scmp.eq.s32.totalorder %s28, 0
      %p201 = por %p199, %p200
      %p202 = scmp.ne.s32.totalorder %s188, %s189
      %p203 = scmp.eq.s32.totalorder %s29, 1
      %p204 = por %p202, %p203
      %p206 = scmp.ne.s32.totalorder %s189, %s205
      %p207 = scmp.eq.s32.totalorder %s29, 0
      %p208 = por %p206, %p207
      %p209 = scmp.le.s32.totalorder 1, %s23
      %p210 = scmp.lt.s32.totalorder %s23, 3
      %p211 = pnand %p209, %p210
      %p212 = pneg %p211
      // Predicated region
      $region9: #{tpu_custom_call.1} parent=5 // pred_check
        _
      $region10: #{tpu_custom_call.1} parent=5 // pred_check_branch
        %214 = sbr.rel (%p211) target = $region12
      $region11: #{tpu_custom_call.1} parent=5 // pred_region
        %s215 = ssub.s32 %s23, 1
        // Predicated region
        $region13: #{tpu_custom_call.1} parent=11 // pred_check
          %p216 = pneg %p70
        $region14: #{tpu_custom_call.1} parent=11 // pred_check_branch
          %218 = sbr.rel (%p216) target = $region16
        $region15: #{tpu_custom_call.1} parent=11 // pred_region
          %220 = vsyncadd [#allocation7], 0
          %s221 = sshll.u32 %s1, 4
          %s222 = int_to_ptr.hbm [resolvable:$true] %s221
          %s223 = sshll.u32 [#allocation6], 4
          %s224 = int_to_ptr.vmem [resolvable:$true] %s223
          %229 = dma.hbm_to_vmem [thread:$0]  %s222, 1344, %s224, [#allocation7], 448, 448, 28
        $region16: #{tpu_custom_call.1} parent=11 // pred_fallthru
          _
        // Predicated region
        $region17: #{tpu_custom_call.1} parent=11 // pred_check
          %p230 = pneg %p91
        $region18: #{tpu_custom_call.1} parent=11 // pred_check_branch
          %232 = sbr.rel (%p230) target = $region20
        $region19: #{tpu_custom_call.1} parent=11 // pred_region
          %234 = vsyncadd [#allocation7], 0
          %s236 = sshll.u32 %s2, 4
          %s237 = int_to_ptr.hbm [resolvable:$true] %s236
          %s238 = sshll.u32 [#allocation8], 4
          %s239 = int_to_ptr.vmem [resolvable:$true] %s238
          %241 = dma.hbm_to_vmem [thread:$0]  %s237, 112, %s239, [#allocation7]
        $region20: #{tpu_custom_call.1} parent=11 // pred_fallthru
          _
        // Predicated region
        $region21: #{tpu_custom_call.1} parent=11 // pred_check
          %p242 = pneg %p112
        $region22: #{tpu_custom_call.1} parent=11 // pred_check_branch
          %244 = sbr.rel (%p242) target = $region24
        $region23: #{tpu_custom_call.1} parent=11 // pred_region
          %246 = vsyncadd [#allocation10], 0
          %s247 = sshll.u32 %s3, 4
          %s248 = int_to_ptr.hbm [resolvable:$true] %s247
          %s249 = sshll.u32 [#allocation9], 4
          %s250 = int_to_ptr.vmem [resolvable:$true] %s249
          %255 = dma.hbm_to_vmem [thread:$0]  %s248, 12288, %s250, [#allocation10], 192, 192, 12
        $region24: #{tpu_custom_call.1} parent=11 // pred_fallthru
          _
        // Predicated region
        $region25: #{tpu_custom_call.1} parent=11 // pred_check
          %p256 = pneg %p133
        $region26: #{tpu_custom_call.1} parent=11 // pred_check_branch
          %258 = sbr.rel (%p256) target = $region28
        $region27: #{tpu_custom_call.1} parent=11 // pred_region
          _
        $region28: #{tpu_custom_call.1} parent=11 // pred_fallthru
          _
        // Predicated region
        $region29: #{tpu_custom_call.1} parent=11 // pred_check
          %p259 = pneg %p154
        $region30: #{tpu_custom_call.1} parent=11 // pred_check_branch
          %261 = sbr.rel (%p259) target = $region32
        $region31: #{tpu_custom_call.1} parent=11 // pred_region
          %263 = vsyncadd [#allocation10], 0
          %s264 = sshll.u32 %s5, 4
          %s265 = int_to_ptr.hbm [resolvable:$true] %s264
          %s266 = sshll.u32 [#allocation11], 4
          %s267 = int_to_ptr.vmem [resolvable:$true] %s266
          %272 = dma.hbm_to_vmem [thread:$0]  %s265, 3072, %s267, [#allocation10], 64, 64, 4
        $region32: #{tpu_custom_call.1} parent=11 // pred_fallthru
          _
        // Predicated region
        $region33: #{tpu_custom_call.1} parent=11 // pred_check
          %p273 = pneg %p175
        $region34: #{tpu_custom_call.1} parent=11 // pred_check_branch
          %275 = sbr.rel (%p273) target = $region36
        $region35: #{tpu_custom_call.1} parent=11 // pred_region
          _
        $region36: #{tpu_custom_call.1} parent=11 // pred_fallthru
          _
      $region12: #{tpu_custom_call.1} parent=5 // pred_fallthru
        _
      %p276 = scmp.lt.s32.totalorder %s23, 2
      // Predicated region
      $region37: #{tpu_custom_call.1} parent=5 // pred_check
        %p277 = pneg %p276
      $region38: #{tpu_custom_call.1} parent=5 // pred_check_branch
        %279 = sbr.rel (%p277) target = $region40
      $region39: #{tpu_custom_call.1} parent=5 // pred_region
        // Predicated region
        $region41: #{tpu_custom_call.1} parent=39 // pred_check
          %p280 = pneg %p43
        $region42: #{tpu_custom_call.1} parent=39 // pred_check_branch
          %282 = sbr.rel (%p280) target = $region44
        $region43: #{tpu_custom_call.1} parent=39 // pred_region
          %s283 = sand.u32 %s33, 1
          %s284 = scalar_lea.sflag [#allocation4], %s283
          %s285 = sand.u32 %s33, 1
          %s286 = smul.addr %s285, 8
          %s287 = scalar_lea.vmem [#allocation3], %s286
          %289 = vsyncadd %s284, 0
          %s290 = smul.addr %s23, 8
          %s291 = scalar_lea.hbm %s0, %s290
          %s293 = sshll.u32 %s291, 4
          %s294 = int_to_ptr.hbm [resolvable:$true] %s293
          %s295 = sshll.u32 %s287, 4
          %s296 = int_to_ptr.vmem [resolvable:$true] %s295
          %298 = dma.hbm_to_vmem [thread:$0]  %s294, 128, %s296, %s284
        $region44: #{tpu_custom_call.1} parent=39 // pred_fallthru
          _
      $region40: #{tpu_custom_call.1} parent=5 // pred_fallthru
        _
      %p299 = scmp.le.s32.totalorder 1, %s23
      %p300 = scmp.lt.s32.totalorder %s23, 3
      %p301 = pnand %p299, %p300
      %p302 = pneg %p301
      // Predicated region
      $region45: #{tpu_custom_call.1} parent=5 // pred_check
        _
      $region46: #{tpu_custom_call.1} parent=5 // pred_check_branch
        %304 = sbr.rel (%p301) target = $region48
      $region47: #{tpu_custom_call.1} parent=5 // pred_region
        %s305 = ssub.s32 %s23, 1
        %s306 = sand.u32 %s36, 1
        %s307 = scalar_lea.sflag [#allocation4], %s306
        %s308 = sand.u32 %s36, 1
        %s309 = smul.addr %s308, 8
        %s310 = scalar_lea.vmem [#allocation3], %s309
        // Predicated region
        $region49: #{tpu_custom_call.1} parent=47 // pred_check
          %p311 = pneg %p49
        $region50: #{tpu_custom_call.1} parent=47 // pred_check_branch
          %313 = sbr.rel (%p311) target = $region52
        $region51: #{tpu_custom_call.1} parent=47 // pred_region
          %315 = dma.done %s307, 128
        $region52: #{tpu_custom_call.1} parent=47 // pred_fallthru
          _
        // Predicated region
        $region53: #{tpu_custom_call.1} parent=47 // pred_check
          %p316 = pneg %p70
        $region54: #{tpu_custom_call.1} parent=47 // pred_check_branch
          %318 = sbr.rel (%p316) target = $region56
        $region55: #{tpu_custom_call.1} parent=47 // pred_region
          %320 = dma.done [#allocation7], 1344
        $region56: #{tpu_custom_call.1} parent=47 // pred_fallthru
          _
        // Predicated region
        $region57: #{tpu_custom_call.1} parent=47 // pred_check
          %p321 = pneg %p91
        $region58: #{tpu_custom_call.1} parent=47 // pred_check_branch
          %323 = sbr.rel (%p321) target = $region60
        $region59: #{tpu_custom_call.1} parent=47 // pred_region
          %325 = dma.done [#allocation7], 112
        $region60: #{tpu_custom_call.1} parent=47 // pred_fallthru
          _
        // Predicated region
        $region61: #{tpu_custom_call.1} parent=47 // pred_check
          %p326 = pneg %p112
        $region62: #{tpu_custom_call.1} parent=47 // pred_check_branch
          %328 = sbr.rel (%p326) target = $region64
        $region63: #{tpu_custom_call.1} parent=47 // pred_region
          %330 = dma.done [#allocation10], 12288
        $region64: #{tpu_custom_call.1} parent=47 // pred_fallthru
          _
        // Predicated region
        $region65: #{tpu_custom_call.1} parent=47 // pred_check
          %p331 = pneg %p154
        $region66: #{tpu_custom_call.1} parent=47 // pred_check_branch
          %333 = sbr.rel (%p331) target = $region68
        $region67: #{tpu_custom_call.1} parent=47 // pred_region
          %335 = dma.done [#allocation10], 3072
        $region68: #{tpu_custom_call.1} parent=47 // pred_fallthru
          _
        %s336 = sand.u32 %s36, 1
        %s337 = scalar_lea.sflag [#allocation4], %s336
        %s338 = sand.u32 %s36, 1
        %s339 = smul.addr %s338, 8
        %s340 = scalar_lea.vmem [#allocation3], %s339
        %p341 = pneg %p49
        %p342 = pneg %p46
        %p343 = pneg %p70
        %p344 = pneg %p67
        %p345 = pneg %p91
        %p346 = pneg %p88
        %p347 = pneg %p112
        %p348 = pneg %p109
        %p349 = pneg %p133
        %p350 = pneg %p130
        %p351 = pneg %p154
        %p352 = pneg %p151
        %p353 = pneg %p175
        %p354 = pneg %p172
        %p355 = pneg %p201
        %p356 = pneg %p198
        %s357 = sand.u32 %s188, 1
        %s358 = scalar_lea.sflag [#allocation5], %s357
        %s359 = sand.u32 %s188, 1
        %s360 = smul.addr %s359, 8
        %s361 = scalar_lea.vmem [#allocation12], %s360
        %v363 = vld [vmem:[%s310] sm:$0xff]
        %v364 = vpack.c.bf16 %v363, %v363
        %v365 = vld [vmem:[#allocation6] sm:$0xff]
        %v366 = vld [vmem:[#allocation6 + $0x8] sm:$0xff]
        %v367 = vld [vmem:[#allocation6 + $0x10] sm:$0xff]
        %v368 = vld [vmem:[#allocation6 + $0x18] sm:$0xf]
        %v369 = vld [vmem:[#allocation6 + $0x1c] sm:$0xff]
        %v370 = vld [vmem:[#allocation6 + $0x24] sm:$0xff]
        %v371 = vld [vmem:[#allocation6 + $0x2c] sm:$0xff]
        %v372 = vld [vmem:[#allocation6 + $0x34] sm:$0xf]
        %v373 = vld [vmem:[#allocation6 + $0x38] sm:$0x33]
        %v374 = vld [vmem:[#allocation6 + $0x40] sm:$0x33]
        %v375 = vld [vmem:[#allocation6 + $0x48] sm:$0x33]
        %v376 = vld [vmem:[#allocation6 + $0x50] sm:$0x3]
        %v377 = vld [vmem:[#allocation8] sm:$0xff]
        %v379 = vperm.slane %v377, 0
        %v380 = vperm.slane %v377, 1
        %v381 = vperm.slane %v377, 2
        %v382 = vperm.slane %v377, 3
        %v383 = vperm.slane %v377, 4
        %v384 = vperm.slane %v377, 5
        %v385 = vperm.slane %v377, 6
        %v405 = vunpack.c.l.b16 %v365
        %v406 = vunpack.c.h.b16 %v365
        %v407 = vunpack.c.l.b16 %v366
        %v408 = vunpack.c.h.b16 %v366
        %v409 = vunpack.c.l.b16 %v367
        %v410 = vunpack.c.h.b16 %v367
        %v411 = vunpack.c.l.b16 %v368
        %v412 = vunpack.c.l.b16 %v369
        %v413 = vunpack.c.h.b16 %v369
        %v414 = vunpack.c.l.b16 %v370
        %v415 = vunpack.c.h.b16 %v370
        %v416 = vunpack.c.l.b16 %v371
        %v417 = vunpack.c.h.b16 %v371
        %v418 = vunpack.c.l.b16 %v372
        %v419 = vunpack.c.l.b16 %v373
        %v420 = vunpack.c.h.b16 %v373
        %v421 = vunpack.c.l.b16 %v374
        %v422 = vunpack.c.h.b16 %v374
        %v423 = vunpack.c.l.b16 %v375
        %v424 = vunpack.c.h.b16 %v375
        %v425 = vunpack.c.l.b16 %v376
        %v426 = vpack.c.b16 %v412, %v405
        %v427 = vpack.c.b16 %v413, %v406
        %v428 = vpack.c.b16 %v414, %v407
        %v429 = vpack.c.b16 %v415, %v408
        %v430 = vpack.c.b16 %v416, %v409
        %v431 = vpack.c.b16 %v417, %v410
        %v432 = vpack.c.b16 %v418, %v411
        %v433 = vpack.c.b16 %v419, %v419
        %v434 = vpack.c.b16 %v420, %v420
        %v435 = vpack.c.b16 %v421, %v421
        %v436 = vpack.c.b16 %v422, %v422
        %v437 = vpack.c.b16 %v423, %v423
        %v438 = vpack.c.b16 %v424, %v424
        %v439 = vpack.c.b16 %v425, %v425
        %vm447 = vcmask 162816
        %v449 = vsel %vm447, %v364, 0
        %vm451 = vcmask 1041408
        %v453 = vsel %vm451, %v433, 0
        %v456 = vsel %vm451, %v434, 0
        %v459 = vsel %vm451, %v435, 0
        %v462 = vsel %vm451, %v436, 0
        %v465 = vsel %vm451, %v437, 0
        %v468 = vsel %vm451, %v438, 0
        %v471 = vsel %vm451, %v439, 0
        %473 = vmatpush.bf16.msra.mxu0 0
        %474 = vmatpush.bf16.msra.mxu0 0
        %475 = vmatpush.bf16.msra.mxu0 0
        %476 = vmatpush.bf16.msra.mxu0 0
        %477 = vmatpush.bf16.msra.mxu0 0
        %478 = vmatpush.bf16.msra.mxu0 0
        %479 = vmatpush.bf16.msra.mxu0 %v453
        %480 = vmatpush.bf16.msra.mxu0 %v426
        %481 = vmatmul.bf16.gmra.mxu0 %v449
        %v482 = vpop.f32.mrf.mxu0
        %v483 = vadd.f32 %v379, %v482
        %v484 = vpop.f32.mrf.mxu0
        %485 = vdwg.mxu0
        %486 = vmatpush.bf16.msra.mxu0 0
        %487 = vmatpush.bf16.msra.mxu0 0
        %488 = vmatpush.bf16.msra.mxu0 0
        %489 = vmatpush.bf16.msra.mxu0 0
        %490 = vmatpush.bf16.msra.mxu0 0
        %491 = vmatpush.bf16.msra.mxu0 0
        %492 = vmatpush.bf16.msra.mxu0 %v456
        %493 = vmatpush.bf16.msra.mxu0 %v427
        %494 = vmatmul.bf16.gmra.mxu0 %v449
        %v495 = vpop.f32.mrf.mxu0
        %v496 = vadd.f32 %v380, %v495
        %v497 = vpop.f32.mrf.mxu0
        %498 = vdwg.mxu0
        %499 = vmatpush.bf16.msra.mxu0 0
        %500 = vmatpush.bf16.msra.mxu0 0
        %501 = vmatpush.bf16.msra.mxu0 0
        %502 = vmatpush.bf16.msra.mxu0 0
        %503 = vmatpush.bf16.msra.mxu0 0
        %504 = vmatpush.bf16.msra.mxu0 0
        %505 = vmatpush.bf16.msra.mxu0 %v459
        %506 = vmatpush.bf16.msra.mxu0 %v428
        %507 = vmatmul.bf16.gmra.mxu0 %v449
        %v508 = vpop.f32.mrf.mxu0
        %v509 = vadd.f32 %v381, %v508
        %v510 = vpop.f32.mrf.mxu0
        %511 = vdwg.mxu0
        %512 = vmatpush.bf16.msra.mxu0 0
        %513 = vmatpush.bf16.msra.mxu0 0
        %514 = vmatpush.bf16.msra.mxu0 0
        %515 = vmatpush.bf16.msra.mxu0 0
        %516 = vmatpush.bf16.msra.mxu0 0
        %517 = vmatpush.bf16.msra.mxu0 0
        %518 = vmatpush.bf16.msra.mxu0 %v462
        %519 = vmatpush.bf16.msra.mxu0 %v429
        %520 = vmatmul.bf16.gmra.mxu0 %v449
        %v521 = vpop.f32.mrf.mxu0
        %v522 = vadd.f32 %v382, %v521
        %v523 = vpop.f32.mrf.mxu0
        %524 = vdwg.mxu0
        %525 = vmatpush.bf16.msra.mxu0 0
        %526 = vmatpush.bf16.msra.mxu0 0
        %527 = vmatpush.bf16.msra.mxu0 0
        %528 = vmatpush.bf16.msra.mxu0 0
        %529 = vmatpush.bf16.msra.mxu0 0
        %530 = vmatpush.bf16.msra.mxu0 0
        %531 = vmatpush.bf16.msra.mxu0 %v465
        %532 = vmatpush.bf16.msra.mxu0 %v430
        %533 = vmatmul.bf16.gmra.mxu0 %v449
        %v534 = vpop.f32.mrf.mxu0
        %v535 = vadd.f32 %v383, %v534
        %v536 = vpop.f32.mrf.mxu0
        %537 = vdwg.mxu0
        %538 = vmatpush.bf16.msra.mxu0 0
        %539 = vmatpush.bf16.msra.mxu0 0
        %540 = vmatpush.bf16.msra.mxu0 0
        %541 = vmatpush.bf16.msra.mxu0 0
        %542 = vmatpush.bf16.msra.mxu0 0
        %543 = vmatpush.bf16.msra.mxu0 0
        %544 = vmatpush.bf16.msra.mxu0 %v468
        %545 = vmatpush.bf16.msra.mxu0 %v431
        %546 = vmatmul.bf16.gmra.mxu0 %v449
        %v547 = vpop.f32.mrf.mxu0
        %v548 = vadd.f32 %v384, %v547
        %v549 = vpop.f32.mrf.mxu0
        %550 = vdwg.mxu0
        %551 = vmatpush.bf16.msra.mxu0 0
        %552 = vmatpush.bf16.msra.mxu0 0
        %553 = vmatpush.bf16.msra.mxu0 0
        %554 = vmatpush.bf16.msra.mxu0 0
        %555 = vmatpush.bf16.msra.mxu0 0
        %556 = vmatpush.bf16.msra.mxu0 0
        %557 = vmatpush.bf16.msra.mxu0 %v471
        %558 = vmatpush.bf16.msra.mxu0 %v432
        %559 = vmatmul.bf16.gmra.mxu0 %v449
        %v560 = vpop.f32.mrf.mxu0
        %v561 = vadd.f32 %v385, %v560
        %v562 = vpop.f32.mrf.mxu0
        %563 = vdwg.mxu0
        %v564 = vadd.f32 %v483, %v496
        %v565 = vadd.f32 %v564, %v509
        %v566 = vadd.f32 %v565, %v522
        %567 = vadd.xlane.f32.xlu0 %v566
        %v568 = vpop.xlane.xlu0 %567
        %v569 = vmul.f32 %v483, %v483
        %v570 = vmul.f32 %v496, %v496
        %v571 = vmul.f32 %v509, %v509
        %v572 = vmul.f32 %v522, %v522
        %v573 = vadd.f32 %v569, %v570
        %v574 = vadd.f32 %v573, %v571
        %v575 = vadd.f32 %v574, %v572
        %576 = vadd.xlane.f32.xlu0 %v575
        %v577 = vpop.xlane.xlu0 %576
        %v578 = vmul.f32 %v568, 0.0025
        %v579 = vmul.f32 %v577, 0.0025
        %v580 = vmul.f32 %v578, %v578
        %v581 = vsub.f32 %v579, %v580
        %v582 = vmax.f32 %v581, 0.0
        %v583 = vsub.f32 %v483, %v578
        %v584 = vsub.f32 %v496, %v578
        %v585 = vsub.f32 %v509, %v578
        %v586 = vsub.f32 %v522, %v578
        %v587 = vadd.f32 %v582, 1e-05
        %v588 = vrsqrt.pop %v587
        %v589 = vmul.f32 %v588, %v587
        %v590 = vmul.f32 %v589, %v588
        %v591 = vmul.f32 0.5, %v590
        %v592 = vsub.f32 1.5, %v591
        %v593 = vmul.f32 %v588, %v592
        %vm594 = vweird.f32 %v587
        %vm595 = vweird.f32 %v588
        %vm596 = vmor %vm594, %vm595
        %v597 = vsel %vm596, %v588, %v593
        %v598 = vmul.f32 %v583, %v597
        %v599 = vmul.f32 %v584, %v597
        %v600 = vmul.f32 %v585, %v597
        %v601 = vmul.f32 %v586, %v597
        %v602 = vmax.f32 %v598, 0.0
        %v603 = vmax.f32 %v599, 0.0
        %v604 = vmax.f32 %v600, 0.0
        %v605 = vmax.f32 %v601, 0.0
        %v606 = vpack.c.bf16 %v602, %v602
        %v607 = vpack.c.bf16 %v603, %v603
        %v608 = vpack.c.bf16 %v604, %v604
        %v609 = vpack.c.bf16 %v605, %v605
        %v610 = vld [vmem:[#allocation9] sm:$0xff]
        %v611 = vld [vmem:[#allocation9 + $0x8] sm:$0xf]
        %v612 = vld [vmem:[#allocation9 + $0xc] sm:$0xff]
        %v613 = vld [vmem:[#allocation9 + $0x14] sm:$0xf]
        %v614 = vld [vmem:[#allocation9 + $0x18] sm:$0xff]
        %v615 = vld [vmem:[#allocation9 + $0x20] sm:$0xf]
        %v616 = vld [vmem:[#allocation9 + $0x24] sm:$0xff]
        %v617 = vld [vmem:[#allocation9 + $0x2c] sm:$0xf]
        %v618 = vld [vmem:[#allocation9 + $0x30] sm:$0xff]
        %v619 = vld [vmem:[#allocation9 + $0x38] sm:$0xf]
        %v620 = vld [vmem:[#allocation9 + $0x3c] sm:$0xff]
        %v621 = vld [vmem:[#allocation9 + $0x44] sm:$0xf]
        %v622 = vld [vmem:[#allocation9 + $0x48] sm:$0xff]
        %v623 = vld [vmem:[#allocation9 + $0x50] sm:$0xf]
        %v624 = vld [vmem:[#allocation9 + $0x54] sm:$0xff]
        %v625 = vld [vmem:[#allocation9 + $0x5c] sm:$0xf]
        %v626 = vld [vmem:[#allocation9 + $0x60] sm:$0xff]
        %v627 = vld [vmem:[#allocation9 + $0x68] sm:$0xf]
        %v628 = vld [vmem:[#allocation9 + $0x6c] sm:$0xff]
        %v629 = vld [vmem:[#allocation9 + $0x74] sm:$0xf]
        %v630 = vld [vmem:[#allocation9 + $0x78] sm:$0xff]
        %v631 = vld [vmem:[#allocation9 + $0x80] sm:$0xf]
        %v632 = vld [vmem:[#allocation9 + $0x84] sm:$0xff]
        %v633 = vld [vmem:[#allocation9 + $0x8c] sm:$0xf]
        %v634 = vld [vmem:[#allocation9 + $0x90] sm:$0xff]
        %v635 = vld [vmem:[#allocation9 + $0x98] sm:$0xf]
        %v636 = vld [vmem:[#allocation9 + $0x9c] sm:$0xff]
        %v637 = vld [vmem:[#allocation9 + $0xa4] sm:$0xf]
        %v638 = vld [vmem:[#allocation9 + $0xa8] sm:$0xff]
        %v639 = vld [vmem:[#allocation9 + $0xb0] sm:$0xf]
        %v640 = vld [vmem:[#allocation9 + $0xb4] sm:$0xff]
        %v641 = vld [vmem:[#allocation9 + $0xbc] sm:$0xf]
        %v642 = vld [vmem:[#allocation9 + $0xc0] sm:$0xff]
        %v643 = vld [vmem:[#allocation9 + $0xc8] sm:$0xf]
        %v644 = vld [vmem:[#allocation9 + $0xcc] sm:$0xff]
        %v645 = vld [vmem:[#allocation9 + $0xd4] sm:$0xf]
        %v646 = vld [vmem:[#allocation9 + $0xd8] sm:$0xff]
        %v647 = vld [vmem:[#allocation9 + $0xe0] sm:$0xf]
        %v648 = vld [vmem:[#allocation9 + $0xe4] sm:$0xff]
        %v649 = vld [vmem:[#allocation9 + $0xec] sm:$0xf]
        %v650 = vld [vmem:[#allocation9 + $0xf0] sm:$0xff]
        %v651 = vld [vmem:[#allocation9 + $0xf8] sm:$0xf]
        %v652 = vld [vmem:[#allocation9 + $0xfc] sm:$0xff]
        %v653 = vld [vmem:[#allocation9 + $0x104] sm:$0xf]
        %v654 = vld [vmem:[#allocation9 + $0x108] sm:$0xff]
        %v655 = vld [vmem:[#allocation9 + $0x110] sm:$0xf]
        %v656 = vld [vmem:[#allocation9 + $0x114] sm:$0xff]
        %v657 = vld [vmem:[#allocation9 + $0x11c] sm:$0xf]
        %v658 = vld [vmem:[#allocation9 + $0x120] sm:$0xff]
        %v659 = vld [vmem:[#allocation9 + $0x128] sm:$0xf]
        %v660 = vld [vmem:[#allocation9 + $0x12c] sm:$0xff]
        %v661 = vld [vmem:[#allocation9 + $0x134] sm:$0xf]
        %v662 = vld [vmem:[#allocation9 + $0x138] sm:$0xff]
        %v663 = vld [vmem:[#allocation9 + $0x140] sm:$0xf]
        %v664 = vld [vmem:[#allocation9 + $0x144] sm:$0xff]
        %v665 = vld [vmem:[#allocation9 + $0x14c] sm:$0xf]
        %v666 = vld [vmem:[#allocation9 + $0x150] sm:$0xff]
        %v667 = vld [vmem:[#allocation9 + $0x158] sm:$0xf]
        %v668 = vld [vmem:[#allocation9 + $0x15c] sm:$0xff]
        %v669 = vld [vmem:[#allocation9 + $0x164] sm:$0xf]
        %v670 = vld [vmem:[#allocation9 + $0x168] sm:$0xff]
        %v671 = vld [vmem:[#allocation9 + $0x170] sm:$0xf]
        %v672 = vld [vmem:[#allocation9 + $0x174] sm:$0xff]
        %v673 = vld [vmem:[#allocation9 + $0x17c] sm:$0xf]
        %v674 = vld [vmem:[#allocation9 + $0x180] sm:$0xff]
        %v675 = vld [vmem:[#allocation9 + $0x188] sm:$0xf]
        %v676 = vld [vmem:[#allocation9 + $0x18c] sm:$0xff]
        %v677 = vld [vmem:[#allocation9 + $0x194] sm:$0xf]
        %v678 = vld [vmem:[#allocation9 + $0x198] sm:$0xff]
        %v679 = vld [vmem:[#allocation9 + $0x1a0] sm:$0xf]
        %v680 = vld [vmem:[#allocation9 + $0x1a4] sm:$0xff]
        %v681 = vld [vmem:[#allocation9 + $0x1ac] sm:$0xf]
        %v682 = vld [vmem:[#allocation9 + $0x1b0] sm:$0xff]
        %v683 = vld [vmem:[#allocation9 + $0x1b8] sm:$0xf]
        %v684 = vld [vmem:[#allocation9 + $0x1bc] sm:$0xff]
        %v685 = vld [vmem:[#allocation9 + $0x1c4] sm:$0xf]
        %v686 = vld [vmem:[#allocation9 + $0x1c8] sm:$0xff]
        %v687 = vld [vmem:[#allocation9 + $0x1d0] sm:$0xf]
        %v688 = vld [vmem:[#allocation9 + $0x1d4] sm:$0xff]
        %v689 = vld [vmem:[#allocation9 + $0x1dc] sm:$0xf]
        %v690 = vld [vmem:[#allocation9 + $0x1e0] sm:$0xff]
        %v691 = vld [vmem:[#allocation9 + $0x1e8] sm:$0xf]
        %v692 = vld [vmem:[#allocation9 + $0x1ec] sm:$0xff]
        %v693 = vld [vmem:[#allocation9 + $0x1f4] sm:$0xf]
        %v694 = vld [vmem:[#allocation9 + $0x1f8] sm:$0xff]
        %v695 = vld [vmem:[#allocation9 + $0x200] sm:$0xf]
        %v696 = vld [vmem:[#allocation9 + $0x204] sm:$0xff]
        %v697 = vld [vmem:[#allocation9 + $0x20c] sm:$0xf]
        %v698 = vld [vmem:[#allocation9 + $0x210] sm:$0xff]
        %v699 = vld [vmem:[#allocation9 + $0x218] sm:$0xf]
        %v700 = vld [vmem:[#allocation9 + $0x21c] sm:$0xff]
        %v701 = vld [vmem:[#allocation9 + $0x224] sm:$0xf]
        %v702 = vld [vmem:[#allocation9 + $0x228] sm:$0xff]
        %v703 = vld [vmem:[#allocation9 + $0x230] sm:$0xf]
        %v704 = vld [vmem:[#allocation9 + $0x234] sm:$0xff]
        %v705 = vld [vmem:[#allocation9 + $0x23c] sm:$0xf]
        %v706 = vld [vmem:[#allocation9 + $0x240] sm:$0xff]
        %v707 = vld [vmem:[#allocation9 + $0x248] sm:$0xf]
        %v708 = vld [vmem:[#allocation9 + $0x24c] sm:$0xff]
        %v709 = vld [vmem:[#allocation9 + $0x254] sm:$0xf]
        %v710 = vld [vmem:[#allocation9 + $0x258] sm:$0xff]
        %v711 = vld [vmem:[#allocation9 + $0x260] sm:$0xf]
        %v712 = vld [vmem:[#allocation9 + $0x264] sm:$0xff]
        %v713 = vld [vmem:[#allocation9 + $0x26c] sm:$0xf]
        %v714 = vld [vmem:[#allocation9 + $0x270] sm:$0xff]
        %v715 = vld [vmem:[#allocation9 + $0x278] sm:$0xf]
        %v716 = vld [vmem:[#allocation9 + $0x27c] sm:$0xff]
        %v717 = vld [vmem:[#allocation9 + $0x284] sm:$0xf]
        %v718 = vld [vmem:[#allocation9 + $0x288] sm:$0xff]
        %v719 = vld [vmem:[#allocation9 + $0x290] sm:$0xf]
        %v720 = vld [vmem:[#allocation9 + $0x294] sm:$0xff]
        %v721 = vld [vmem:[#allocation9 + $0x29c] sm:$0xf]
        %v722 = vld [vmem:[#allocation9 + $0x2a0] sm:$0xff]
        %v723 = vld [vmem:[#allocation9 + $0x2a8] sm:$0xf]
        %v724 = vld [vmem:[#allocation9 + $0x2ac] sm:$0xff]
        %v725 = vld [vmem:[#allocation9 + $0x2b4] sm:$0xf]
        %v726 = vld [vmem:[#allocation9 + $0x2b8] sm:$0xff]
        %v727 = vld [vmem:[#allocation9 + $0x2c0] sm:$0xf]
        %v728 = vld [vmem:[#allocation9 + $0x2c4] sm:$0xff]
        %v729 = vld [vmem:[#allocation9 + $0x2cc] sm:$0xf]
        %v730 = vld [vmem:[#allocation9 + $0x2d0] sm:$0xff]
        %v731 = vld [vmem:[#allocation9 + $0x2d8] sm:$0xf]
        %v732 = vld [vmem:[#allocation9 + $0x2dc] sm:$0xff]
        %v733 = vld [vmem:[#allocation9 + $0x2e4] sm:$0xf]
        %v734 = vld [vmem:[#allocation9 + $0x2e8] sm:$0xff]
        %v735 = vld [vmem:[#allocation9 + $0x2f0] sm:$0xf]
        %v736 = vld [vmem:[#allocation9 + $0x2f4] sm:$0xff]
        %v737 = vld [vmem:[#allocation9 + $0x2fc] sm:$0xf]
        %v738 = vld [vmem:[%s4] sm:$0x7]
        %v740 = vperm.slane %v738, 0
        %v741 = vperm.slane %v738, 1
        %v742 = vperm.slane %v738, 2
        %v874 = vunpack.c.l.b16 %v610
        %v875 = vunpack.c.h.b16 %v610
        %v876 = vunpack.c.l.b16 %v611
        %v877 = vunpack.c.l.b16 %v612
        %v878 = vunpack.c.h.b16 %v612
        %v879 = vunpack.c.l.b16 %v613
        %v880 = vunpack.c.l.b16 %v614
        %v881 = vunpack.c.h.b16 %v614
        %v882 = vunpack.c.l.b16 %v615
        %v883 = vunpack.c.l.b16 %v616
        %v884 = vunpack.c.h.b16 %v616
        %v885 = vunpack.c.l.b16 %v617
        %v886 = vunpack.c.l.b16 %v618
        %v887 = vunpack.c.h.b16 %v618
        %v888 = vunpack.c.l.b16 %v619
        %v889 = vunpack.c.l.b16 %v620
        %v890 = vunpack.c.h.b16 %v620
        %v891 = vunpack.c.l.b16 %v621
        %v892 = vunpack.c.l.b16 %v622
        %v893 = vunpack.c.h.b16 %v622
        %v894 = vunpack.c.l.b16 %v623
        %v895 = vunpack.c.l.b16 %v624
        %v896 = vunpack.c.h.b16 %v624
        %v897 = vunpack.c.l.b16 %v625
        %v898 = vunpack.c.l.b16 %v626
        %v899 = vunpack.c.h.b16 %v626
        %v900 = vunpack.c.l.b16 %v627
        %v901 = vunpack.c.l.b16 %v628
        %v902 = vunpack.c.h.b16 %v628
        %v903 = vunpack.c.l.b16 %v629
        %v904 = vunpack.c.l.b16 %v630
        %v905 = vunpack.c.h.b16 %v630
        %v906 = vunpack.c.l.b16 %v631
        %v907 = vunpack.c.l.b16 %v632
        %v908 = vunpack.c.h.b16 %v632
        %v909 = vunpack.c.l.b16 %v633
        %v910 = vunpack.c.l.b16 %v634
        %v911 = vunpack.c.h.b16 %v634
        %v912 = vunpack.c.l.b16 %v635
        %v913 = vunpack.c.l.b16 %v636
        %v914 = vunpack.c.h.b16 %v636
        %v915 = vunpack.c.l.b16 %v637
        %v916 = vunpack.c.l.b16 %v638
        %v917 = vunpack.c.h.b16 %v638
        %v918 = vunpack.c.l.b16 %v639
        %v919 = vunpack.c.l.b16 %v640
        %v920 = vunpack.c.h.b16 %v640
        %v921 = vunpack.c.l.b16 %v641
        %v922 = vunpack.c.l.b16 %v642
        %v923 = vunpack.c.h.b16 %v642
        %v924 = vunpack.c.l.b16 %v643
        %v925 = vunpack.c.l.b16 %v644
        %v926 = vunpack.c.h.b16 %v644
        %v927 = vunpack.c.l.b16 %v645
        %v928 = vunpack.c.l.b16 %v646
        %v929 = vunpack.c.h.b16 %v646
        %v930 = vunpack.c.l.b16 %v647
        %v931 = vunpack.c.l.b16 %v648
        %v932 = vunpack.c.h.b16 %v648
        %v933 = vunpack.c.l.b16 %v649
        %v934 = vunpack.c.l.b16 %v650
        %v935 = vunpack.c.h.b16 %v650
        %v936 = vunpack.c.l.b16 %v651
        %v937 = vunpack.c.l.b16 %v652
        %v938 = vunpack.c.h.b16 %v652
        %v939 = vunpack.c.l.b16 %v653
        %v940 = vunpack.c.l.b16 %v654
        %v941 = vunpack.c.h.b16 %v654
        %v942 = vunpack.c.l.b16 %v655
        %v943 = vunpack.c.l.b16 %v656
        %v944 = vunpack.c.h.b16 %v656
        %v945 = vunpack.c.l.b16 %v657
        %v946 = vunpack.c.l.b16 %v658
        %v947 = vunpack.c.h.b16 %v658
        %v948 = vunpack.c.l.b16 %v659
        %v949 = vunpack.c.l.b16 %v660
        %v950 = vunpack.c.h.b16 %v660
        %v951 = vunpack.c.l.b16 %v661
        %v952 = vunpack.c.l.b16 %v662
        %v953 = vunpack.c.h.b16 %v662
        %v954 = vunpack.c.l.b16 %v663
        %v955 = vunpack.c.l.b16 %v664
        %v956 = vunpack.c.h.b16 %v664
        %v957 = vunpack.c.l.b16 %v665
        %v958 = vunpack.c.l.b16 %v666
        %v959 = vunpack.c.h.b16 %v666
        %v960 = vunpack.c.l.b16 %v667
        %v961 = vunpack.c.l.b16 %v668
        %v962 = vunpack.c.h.b16 %v668
        %v963 = vunpack.c.l.b16 %v669
        %v964 = vunpack.c.l.b16 %v670
        %v965 = vunpack.c.h.b16 %v670
        %v966 = vunpack.c.l.b16 %v671
        %v967 = vunpack.c.l.b16 %v672
        %v968 = vunpack.c.h.b16 %v672
        %v969 = vunpack.c.l.b16 %v673
        %v970 = vunpack.c.l.b16 %v674
        %v971 = vunpack.c.h.b16 %v674
        %v972 = vunpack.c.l.b16 %v675
        %v973 = vunpack.c.l.b16 %v676
        %v974 = vunpack.c.h.b16 %v676
        %v975 = vunpack.c.l.b16 %v677
        %v976 = vunpack.c.l.b16 %v678
        %v977 = vunpack.c.h.b16 %v678
        %v978 = vunpack.c.l.b16 %v679
        %v979 = vunpack.c.l.b16 %v680
        %v980 = vunpack.c.h.b16 %v680
        %v981 = vunpack.c.l.b16 %v681
        %v982 = vunpack.c.l.b16 %v682
        %v983 = vunpack.c.h.b16 %v682
        %v984 = vunpack.c.l.b16 %v683
        %v985 = vunpack.c.l.b16 %v684
        %v986 = vunpack.c.h.b16 %v684
        %v987 = vunpack.c.l.b16 %v685
        %v988 = vunpack.c.l.b16 %v686
        %v989 = vunpack.c.h.b16 %v686
        %v990 = vunpack.c.l.b16 %v687
        %v991 = vunpack.c.l.b16 %v688
        %v992 = vunpack.c.h.b16 %v688
        %v993 = vunpack.c.l.b16 %v689
        %v994 = vunpack.c.l.b16 %v690
        %v995 = vunpack.c.h.b16 %v690
        %v996 = vunpack.c.l.b16 %v691
        %v997 = vunpack.c.l.b16 %v692
        %v998 = vunpack.c.h.b16 %v692
        %v999 = vunpack.c.l.b16 %v693
        %v1000 = vunpack.c.l.b16 %v694
        %v1001 = vunpack.c.h.b16 %v694
        %v1002 = vunpack.c.l.b16 %v695
        %v1003 = vunpack.c.l.b16 %v696
        %v1004 = vunpack.c.h.b16 %v696
        %v1005 = vunpack.c.l.b16 %v697
        %v1006 = vunpack.c.l.b16 %v698
        %v1007 = vunpack.c.h.b16 %v698
        %v1008 = vunpack.c.l.b16 %v699
        %v1009 = vunpack.c.l.b16 %v700
        %v1010 = vunpack.c.h.b16 %v700
        %v1011 = vunpack.c.l.b16 %v701
        %v1012 = vunpack.c.l.b16 %v702
        %v1013 = vunpack.c.h.b16 %v702
        %v1014 = vunpack.c.l.b16 %v703
        %v1015 = vunpack.c.l.b16 %v704
        %v1016 = vunpack.c.h.b16 %v704
        %v1017 = vunpack.c.l.b16 %v705
        %v1018 = vunpack.c.l.b16 %v706
        %v1019 = vunpack.c.h.b16 %v706
        %v1020 = vunpack.c.l.b16 %v707
        %v1021 = vunpack.c.l.b16 %v708
        %v1022 = vunpack.c.h.b16 %v708
        %v1023 = vunpack.c.l.b16 %v709
        %v1024 = vunpack.c.l.b16 %v710
        %v1025 = vunpack.c.h.b16 %v710
        %v1026 = vunpack.c.l.b16 %v711
        %v1027 = vunpack.c.l.b16 %v712
        %v1028 = vunpack.c.h.b16 %v712
        %v1029 = vunpack.c.l.b16 %v713
        %v1030 = vunpack.c.l.b16 %v714
        %v1031 = vunpack.c.h.b16 %v714
        %v1032 = vunpack.c.l.b16 %v715
        %v1033 = vunpack.c.l.b16 %v716
        %v1034 = vunpack.c.h.b16 %v716
        %v1035 = vunpack.c.l.b16 %v717
        %v1036 = vunpack.c.l.b16 %v718
        %v1037 = vunpack.c.h.b16 %v718
        %v1038 = vunpack.c.l.b16 %v719
        %v1039 = vunpack.c.l.b16 %v720
        %v1040 = vunpack.c.h.b16 %v720
        %v1041 = vunpack.c.l.b16 %v721
        %v1042 = vunpack.c.l.b16 %v722
        %v1043 = vunpack.c.h.b16 %v722
        %v1044 = vunpack.c.l.b16 %v723
        %v1045 = vunpack.c.l.b16 %v724
        %v1046 = vunpack.c.h.b16 %v724
        %v1047 = vunpack.c.l.b16 %v725
        %v1048 = vunpack.c.l.b16 %v726
        %v1049 = vunpack.c.h.b16 %v726
        %v1050 = vunpack.c.l.b16 %v727
        %v1051 = vunpack.c.l.b16 %v728
        %v1052 = vunpack.c.h.b16 %v728
        %v1053 = vunpack.c.l.b16 %v729
        %v1054 = vunpack.c.l.b16 %v730
        %v1055 = vunpack.c.h.b16 %v730
        %v1056 = vunpack.c.l.b16 %v731
        %v1057 = vunpack.c.l.b16 %v732
        %v1058 = vunpack.c.h.b16 %v732
        %v1059 = vunpack.c.l.b16 %v733
        %v1060 = vunpack.c.l.b16 %v734
        %v1061 = vunpack.c.h.b16 %v734
        %v1062 = vunpack.c.l.b16 %v735
        %v1063 = vunpack.c.l.b16 %v736
        %v1064 = vunpack.c.h.b16 %v736
        %v1065 = vunpack.c.l.b16 %v737
        %v1066 = vpack.c.b16 %v877, %v874
        %v1067 = vpack.c.b16 %v878, %v875
        %v1068 = vpack.c.b16 %v879, %v876
        %v1069 = vpack.c.b16 %v883, %v880
        %v1070 = vpack.c.b16 %v884, %v881
        %v1071 = vpack.c.b16 %v885, %v882
        %v1072 = vpack.c.b16 %v889, %v886
        %v1073 = vpack.c.b16 %v890, %v887
        %v1074 = vpack.c.b16 %v891, %v888
        %v1075 = vpack.c.b16 %v895, %v892
        %v1076 = vpack.c.b16 %v896, %v893
        %v1077 = vpack.c.b16 %v897, %v894
        %v1078 = vpack.c.b16 %v901, %v898
        %v1079 = vpack.c.b16 %v902, %v899
        %v1080 = vpack.c.b16 %v903, %v900
        %v1081 = vpack.c.b16 %v907, %v904
        %v1082 = vpack.c.b16 %v908, %v905
        %v1083 = vpack.c.b16 %v909, %v906
        %v1084 = vpack.c.b16 %v913, %v910
        %v1085 = vpack.c.b16 %v914, %v911
        %v1086 = vpack.c.b16 %v915, %v912
        %v1087 = vpack.c.b16 %v919, %v916
        %v1088 = vpack.c.b16 %v920, %v917
        %v1089 = vpack.c.b16 %v921, %v918
        %v1090 = vpack.c.b16 %v925, %v922
        %v1091 = vpack.c.b16 %v926, %v923
        %v1092 = vpack.c.b16 %v927, %v924
        %v1093 = vpack.c.b16 %v931, %v928
        %v1094 = vpack.c.b16 %v932, %v929
        %v1095 = vpack.c.b16 %v933, %v930
        %v1096 = vpack.c.b16 %v937, %v934
        %v1097 = vpack.c.b16 %v938, %v935
        %v1098 = vpack.c.b16 %v939, %v936
        %v1099 = vpack.c.b16 %v943, %v940
        %v1100 = vpack.c.b16 %v944, %v941
        %v1101 = vpack.c.b16 %v945, %v942
        %v1102 = vpack.c.b16 %v949, %v946
        %v1103 = vpack.c.b16 %v950, %v947
        %v1104 = vpack.c.b16 %v951, %v948
        %v1105 = vpack.c.b16 %v955, %v952
        %v1106 = vpack.c.b16 %v956, %v953
        %v1107 = vpack.c.b16 %v957, %v954
        %v1108 = vpack.c.b16 %v961, %v958
        %v1109 = vpack.c.b16 %v962, %v959
        %v1110 = vpack.c.b16 %v963, %v960
        %v1111 = vpack.c.b16 %v967, %v964
        %v1112 = vpack.c.b16 %v968, %v965
        %v1113 = vpack.c.b16 %v969, %v966
        %v1114 = vpack.c.b16 %v973, %v970
        %v1115 = vpack.c.b16 %v974, %v971
        %v1116 = vpack.c.b16 %v975, %v972
        %v1117 = vpack.c.b16 %v979, %v976
        %v1118 = vpack.c.b16 %v980, %v977
        %v1119 = vpack.c.b16 %v981, %v978
        %v1120 = vpack.c.b16 %v985, %v982
        %v1121 = vpack.c.b16 %v986, %v983
        %v1122 = vpack.c.b16 %v987, %v984
        %v1123 = vpack.c.b16 %v991, %v988
        %v1124 = vpack.c.b16 %v992, %v989
        %v1125 = vpack.c.b16 %v993, %v990
        %v1126 = vpack.c.b16 %v997, %v994
        %v1127 = vpack.c.b16 %v998, %v995
        %v1128 = vpack.c.b16 %v999, %v996
        %v1129 = vpack.c.b16 %v1003, %v1000
        %v1130 = vpack.c.b16 %v1004, %v1001
        %v1131 = vpack.c.b16 %v1005, %v1002
        %v1132 = vpack.c.b16 %v1009, %v1006
        %v1133 = vpack.c.b16 %v1010, %v1007
        %v1134 = vpack.c.b16 %v1011, %v1008
        %v1135 = vpack.c.b16 %v1015, %v1012
        %v1136 = vpack.c.b16 %v1016, %v1013
        %v1137 = vpack.c.b16 %v1017, %v1014
        %v1138 = vpack.c.b16 %v1021, %v1018
        %v1139 = vpack.c.b16 %v1022, %v1019
        %v1140 = vpack.c.b16 %v1023, %v1020
        %v1141 = vpack.c.b16 %v1027, %v1024
        %v1142 = vpack.c.b16 %v1028, %v1025
        %v1143 = vpack.c.b16 %v1029, %v1026
        %v1144 = vpack.c.b16 %v1033, %v1030
        %v1145 = vpack.c.b16 %v1034, %v1031
        %v1146 = vpack.c.b16 %v1035, %v1032
        %v1147 = vpack.c.b16 %v1039, %v1036
        %v1148 = vpack.c.b16 %v1040, %v1037
        %v1149 = vpack.c.b16 %v1041, %v1038
        %v1150 = vpack.c.b16 %v1045, %v1042
        %v1151 = vpack.c.b16 %v1046, %v1043
        %v1152 = vpack.c.b16 %v1047, %v1044
        %v1153 = vpack.c.b16 %v1051, %v1048
        %v1154 = vpack.c.b16 %v1052, %v1049
        %v1155 = vpack.c.b16 %v1053, %v1050
        %v1156 = vpack.c.b16 %v1057, %v1054
        %v1157 = vpack.c.b16 %v1058, %v1055
        %v1158 = vpack.c.b16 %v1059, %v1056
        %v1159 = vpack.c.b16 %v1063, %v1060
        %v1160 = vpack.c.b16 %v1064, %v1061
        %v1161 = vpack.c.b16 %v1065, %v1062
        %1258 = vmatpush.bf16.msra.mxu0 %v1087
        %1259 = vmatpush.bf16.msra.mxu0 %v1084
        %1260 = vmatpush.bf16.msra.mxu0 %v1081
        %1261 = vmatpush.bf16.msra.mxu0 %v1078
        %1262 = vmatpush.bf16.msra.mxu0 %v1075
        %1263 = vmatpush.bf16.msra.mxu0 %v1072
        %1264 = vmatpush.bf16.msra.mxu0 %v1069
        %1265 = vmatpush.bf16.msra.mxu0 %v1066
        %1266 = vmatmul.bf16.gmra.mxu0 %v606
        %v1267 = vpop.f32.mrf.mxu0
        %v1268 = vadd.f32 %v740, %v1267
        %v1269 = vpop.f32.mrf.mxu0
        %1270 = vdwg.mxu0
        %1271 = vmatpush.bf16.msra.mxu0 %v1111
        %1272 = vmatpush.bf16.msra.mxu0 %v1108
        %1273 = vmatpush.bf16.msra.mxu0 %v1105
        %1274 = vmatpush.bf16.msra.mxu0 %v1102
        %1275 = vmatpush.bf16.msra.mxu0 %v1099
        %1276 = vmatpush.bf16.msra.mxu0 %v1096
        %1277 = vmatpush.bf16.msra.mxu0 %v1093
        %1278 = vmatpush.bf16.msra.mxu0 %v1090
        %1279 = vmatmul.bf16.gmra.mxu0 %v607
        %v1280 = vpop.f32.mrf.mxu0
        %v1281 = vadd.f32 %v1268, %v1280
        %v1282 = vpop.f32.mrf.mxu0
        %1283 = vdwg.mxu0
        %1284 = vmatpush.bf16.msra.mxu0 %v1135
        %1285 = vmatpush.bf16.msra.mxu0 %v1132
        %1286 = vmatpush.bf16.msra.mxu0 %v1129
        %1287 = vmatpush.bf16.msra.mxu0 %v1126
        %1288 = vmatpush.bf16.msra.mxu0 %v1123
        %1289 = vmatpush.bf16.msra.mxu0 %v1120
        %1290 = vmatpush.bf16.msra.mxu0 %v1117
        %1291 = vmatpush.bf16.msra.mxu0 %v1114
        %1292 = vmatmul.bf16.gmra.mxu0 %v608
        %v1293 = vpop.f32.mrf.mxu0
        %v1294 = vadd.f32 %v1281, %v1293
        %v1295 = vpop.f32.mrf.mxu0
        %1296 = vdwg.mxu0
        %1297 = vmatpush.bf16.msra.mxu0 %v1159
        %1298 = vmatpush.bf16.msra.mxu0 %v1156
        %1299 = vmatpush.bf16.msra.mxu0 %v1153
        %1300 = vmatpush.bf16.msra.mxu0 %v1150
        %1301 = vmatpush.bf16.msra.mxu0 %v1147
        %1302 = vmatpush.bf16.msra.mxu0 %v1144
        %1303 = vmatpush.bf16.msra.mxu0 %v1141
        %1304 = vmatpush.bf16.msra.mxu0 %v1138
        %1305 = vmatmul.bf16.gmra.mxu0 %v609
        %v1306 = vpop.f32.mrf.mxu0
        %v1307 = vadd.f32 %v1294, %v1306
        %v1308 = vpop.f32.mrf.mxu0
        %1309 = vdwg.mxu0
        %1310 = vmatpush.bf16.msra.mxu0 %v1088
        %1311 = vmatpush.bf16.msra.mxu0 %v1085
        %1312 = vmatpush.bf16.msra.mxu0 %v1082
        %1313 = vmatpush.bf16.msra.mxu0 %v1079
        %1314 = vmatpush.bf16.msra.mxu0 %v1076
        %1315 = vmatpush.bf16.msra.mxu0 %v1073
        %1316 = vmatpush.bf16.msra.mxu0 %v1070
        %1317 = vmatpush.bf16.msra.mxu0 %v1067
        %1318 = vmatmul.bf16.gmra.mxu0 %v606
        %v1319 = vpop.f32.mrf.mxu0
        %v1320 = vadd.f32 %v741, %v1319
        %v1321 = vpop.f32.mrf.mxu0
        %1322 = vdwg.mxu0
        %1323 = vmatpush.bf16.msra.mxu0 %v1112
        %1324 = vmatpush.bf16.msra.mxu0 %v1109
        %1325 = vmatpush.bf16.msra.mxu0 %v1106
        %1326 = vmatpush.bf16.msra.mxu0 %v1103
        %1327 = vmatpush.bf16.msra.mxu0 %v1100
        %1328 = vmatpush.bf16.msra.mxu0 %v1097
        %1329 = vmatpush.bf16.msra.mxu0 %v1094
        %1330 = vmatpush.bf16.msra.mxu0 %v1091
        %1331 = vmatmul.bf16.gmra.mxu0 %v607
        %v1332 = vpop.f32.mrf.mxu0
        %v1333 = vadd.f32 %v1320, %v1332
        %v1334 = vpop.f32.mrf.mxu0
        %1335 = vdwg.mxu0
        %1336 = vmatpush.bf16.msra.mxu0 %v1136
        %1337 = vmatpush.bf16.msra.mxu0 %v1133
        %1338 = vmatpush.bf16.msra.mxu0 %v1130
        %1339 = vmatpush.bf16.msra.mxu0 %v1127
        %1340 = vmatpush.bf16.msra.mxu0 %v1124
        %1341 = vmatpush.bf16.msra.mxu0 %v1121
        %1342 = vmatpush.bf16.msra.mxu0 %v1118
        %1343 = vmatpush.bf16.msra.mxu0 %v1115
        %1344 = vmatmul.bf16.gmra.mxu0 %v608
        %v1345 = vpop.f32.mrf.mxu0
        %v1346 = vadd.f32 %v1333, %v1345
        %v1347 = vpop.f32.mrf.mxu0
        %1348 = vdwg.mxu0
        %1349 = vmatpush.bf16.msra.mxu0 %v1160
        %1350 = vmatpush.bf16.msra.mxu0 %v1157
        %1351 = vmatpush.bf16.msra.mxu0 %v1154
        %1352 = vmatpush.bf16.msra.mxu0 %v1151
        %1353 = vmatpush.bf16.msra.mxu0 %v1148
        %1354 = vmatpush.bf16.msra.mxu0 %v1145
        %1355 = vmatpush.bf16.msra.mxu0 %v1142
        %1356 = vmatpush.bf16.msra.mxu0 %v1139
        %1357 = vmatmul.bf16.gmra.mxu0 %v609
        %v1358 = vpop.f32.mrf.mxu0
        %v1359 = vadd.f32 %v1346, %v1358
        %v1360 = vpop.f32.mrf.mxu0
        %1361 = vdwg.mxu0
        %1362 = vmatpush.bf16.msra.mxu0 %v1089
        %1363 = vmatpush.bf16.msra.mxu0 %v1086
        %1364 = vmatpush.bf16.msra.mxu0 %v1083
        %1365 = vmatpush.bf16.msra.mxu0 %v1080
        %1366 = vmatpush.bf16.msra.mxu0 %v1077
        %1367 = vmatpush.bf16.msra.mxu0 %v1074
        %1368 = vmatpush.bf16.msra.mxu0 %v1071
        %1369 = vmatpush.bf16.msra.mxu0 %v1068
        %1370 = vmatmul.bf16.gmra.mxu0 %v606
        %v1371 = vpop.f32.mrf.mxu0
        %v1372 = vadd.f32 %v742, %v1371
        %v1373 = vpop.f32.mrf.mxu0
        %1374 = vdwg.mxu0
        %1375 = vmatpush.bf16.msra.mxu0 %v1113
        %1376 = vmatpush.bf16.msra.mxu0 %v1110
        %1377 = vmatpush.bf16.msra.mxu0 %v1107
        %1378 = vmatpush.bf16.msra.mxu0 %v1104
        %1379 = vmatpush.bf16.msra.mxu0 %v1101
        %1380 = vmatpush.bf16.msra.mxu0 %v1098
        %1381 = vmatpush.bf16.msra.mxu0 %v1095
        %1382 = vmatpush.bf16.msra.mxu0 %v1092
        %1383 = vmatmul.bf16.gmra.mxu0 %v607
        %v1384 = vpop.f32.mrf.mxu0
        %v1385 = vadd.f32 %v1372, %v1384
        %v1386 = vpop.f32.mrf.mxu0
        %1387 = vdwg.mxu0
        %1388 = vmatpush.bf16.msra.mxu0 %v1137
        %1389 = vmatpush.bf16.msra.mxu0 %v1134
        %1390 = vmatpush.bf16.msra.mxu0 %v1131
        %1391 = vmatpush.bf16.msra.mxu0 %v1128
        %1392 = vmatpush.bf16.msra.mxu0 %v1125
        %1393 = vmatpush.bf16.msra.mxu0 %v1122
        %1394 = vmatpush.bf16.msra.mxu0 %v1119
        %1395 = vmatpush.bf16.msra.mxu0 %v1116
        %1396 = vmatmul.bf16.gmra.mxu0 %v608
        %v1397 = vpop.f32.mrf.mxu0
        %v1398 = vadd.f32 %v1385, %v1397
        %v1399 = vpop.f32.mrf.mxu0
        %1400 = vdwg.mxu0
        %1401 = vmatpush.bf16.msra.mxu0 %v1161
        %1402 = vmatpush.bf16.msra.mxu0 %v1158
        %1403 = vmatpush.bf16.msra.mxu0 %v1155
        %1404 = vmatpush.bf16.msra.mxu0 %v1152
        %1405 = vmatpush.bf16.msra.mxu0 %v1149
        %1406 = vmatpush.bf16.msra.mxu0 %v1146
        %1407 = vmatpush.bf16.msra.mxu0 %v1143
        %1408 = vmatpush.bf16.msra.mxu0 %v1140
        %1409 = vmatmul.bf16.gmra.mxu0 %v609
        %v1410 = vpop.f32.mrf.mxu0
        %v1411 = vadd.f32 %v1398, %v1410
        %v1412 = vpop.f32.mrf.mxu0
        %1413 = vdwg.mxu0
        %v1414 = vadd.f32 %v1307, %v1359
        %v1415 = vadd.f32 %v1414, %v1411
        %1416 = vadd.xlane.f32.xlu0 %v1415
        %v1417 = vpop.xlane.xlu0 %1416
        %v1418 = vmul.f32 %v1307, %v1307
        %v1419 = vmul.f32 %v1359, %v1359
        %v1420 = vmul.f32 %v1411, %v1411
        %v1421 = vadd.f32 %v1418, %v1419
        %v1422 = vadd.f32 %v1421, %v1420
        %1423 = vadd.xlane.f32.xlu0 %v1422
        %v1424 = vpop.xlane.xlu0 %1423
        %v1425 = vmul.f32 %v1417, 0.0033333334
        %v1426 = vmul.f32 %v1424, 0.0033333334
        %v1427 = vmul.f32 %v1425, %v1425
        %v1428 = vsub.f32 %v1426, %v1427
        %v1429 = vmax.f32 %v1428, 0.0
        %v1430 = vsub.f32 %v1307, %v1425
        %v1431 = vsub.f32 %v1359, %v1425
        %v1432 = vsub.f32 %v1411, %v1425
        %v1433 = vadd.f32 %v1429, 1e-05
        %v1434 = vrsqrt.pop %v1433
        %v1435 = vmul.f32 %v1434, %v1433
        %v1436 = vmul.f32 %v1435, %v1434
        %v1437 = vmul.f32 0.5, %v1436
        %v1438 = vsub.f32 1.5, %v1437
        %v1439 = vmul.f32 %v1434, %v1438
        %vm1440 = vweird.f32 %v1433
        %vm1441 = vweird.f32 %v1434
        %vm1442 = vmor %vm1440, %vm1441
        %v1443 = vsel %vm1442, %v1434, %v1439
        %v1444 = vmul.f32 %v1430, %v1443
        %v1445 = vmul.f32 %v1431, %v1443
        %v1446 = vmul.f32 %v1432, %v1443
        %v1447 = vmax.f32 %v1444, 0.0
        %v1448 = vmax.f32 %v1445, 0.0
        %v1449 = vmax.f32 %v1446, 0.0
        %v1450 = vadd.f32 %v535, %v1447
        %v1451 = vadd.f32 %v548, %v1448
        %v1452 = vadd.f32 %v561, %v1449
        %v1453 = vmax.f32 %v1450, 0.0
        %v1454 = vmax.f32 %v1451, 0.0
        %v1455 = vmax.f32 %v1452, 0.0
        %v1456 = vpack.c.bf16 %v1453, %v1453
        %v1457 = vpack.c.bf16 %v1454, %v1454
        %v1458 = vpack.c.bf16 %v1455, %v1455
        %v1459 = vld [vmem:[#allocation11] sm:$0xf]
        %v1460 = vld [vmem:[#allocation11 + $0x4] sm:$0xf]
        %v1461 = vld [vmem:[#allocation11 + $0x8] sm:$0xf]
        %v1462 = vld [vmem:[#allocation11 + $0xc] sm:$0xf]
        %v1463 = vld [vmem:[#allocation11 + $0x10] sm:$0xf]
        %v1464 = vld [vmem:[#allocation11 + $0x14] sm:$0xf]
        %v1465 = vld [vmem:[#allocation11 + $0x18] sm:$0xf]
        %v1466 = vld [vmem:[#allocation11 + $0x1c] sm:$0xf]
        %v1467 = vld [vmem:[#allocation11 + $0x20] sm:$0xf]
        %v1468 = vld [vmem:[#allocation11 + $0x24] sm:$0xf]
        %v1469 = vld [vmem:[#allocation11 + $0x28] sm:$0xf]
        %v1470 = vld [vmem:[#allocation11 + $0x2c] sm:$0xf]
        %v1471 = vld [vmem:[#allocation11 + $0x30] sm:$0xf]
        %v1472 = vld [vmem:[#allocation11 + $0x34] sm:$0xf]
        %v1473 = vld [vmem:[#allocation11 + $0x38] sm:$0xf]
        %v1474 = vld [vmem:[#allocation11 + $0x3c] sm:$0xf]
        %v1475 = vld [vmem:[#allocation11 + $0x40] sm:$0xf]
        %v1476 = vld [vmem:[#allocation11 + $0x44] sm:$0xf]
        %v1477 = vld [vmem:[#allocation11 + $0x48] sm:$0xf]
        %v1478 = vld [vmem:[#allocation11 + $0x4c] sm:$0xf]
        %v1479 = vld [vmem:[#allocation11 + $0x50] sm:$0xf]
        %v1480 = vld [vmem:[#allocation11 + $0x54] sm:$0xf]
        %v1481 = vld [vmem:[#allocation11 + $0x58] sm:$0xf]
        %v1482 = vld [vmem:[#allocation11 + $0x5c] sm:$0xf]
        %v1483 = vld [vmem:[#allocation11 + $0x60] sm:$0xf]
        %v1484 = vld [vmem:[#allocation11 + $0x64] sm:$0xf]
        %v1485 = vld [vmem:[#allocation11 + $0x68] sm:$0xf]
        %v1486 = vld [vmem:[#allocation11 + $0x6c] sm:$0xf]
        %v1487 = vld [vmem:[#allocation11 + $0x70] sm:$0xf]
        %v1488 = vld [vmem:[#allocation11 + $0x74] sm:$0xf]
        %v1489 = vld [vmem:[#allocation11 + $0x78] sm:$0xf]
        %v1490 = vld [vmem:[#allocation11 + $0x7c] sm:$0xf]
        %v1491 = vld [vmem:[#allocation11 + $0x80] sm:$0xf]
        %v1492 = vld [vmem:[#allocation11 + $0x84] sm:$0xf]
        %v1493 = vld [vmem:[#allocation11 + $0x88] sm:$0xf]
        %v1494 = vld [vmem:[#allocation11 + $0x8c] sm:$0xf]
        %v1495 = vld [vmem:[#allocation11 + $0x90] sm:$0xf]
        %v1496 = vld [vmem:[#allocation11 + $0x94] sm:$0xf]
        %v1497 = vld [vmem:[#allocation11 + $0x98] sm:$0xf]
        %v1498 = vld [vmem:[#allocation11 + $0x9c] sm:$0xf]
        %v1499 = vld [vmem:[#allocation11 + $0xa0] sm:$0xf]
        %v1500 = vld [vmem:[#allocation11 + $0xa4] sm:$0xf]
        %v1501 = vld [vmem:[#allocation11 + $0xa8] sm:$0xf]
        %v1502 = vld [vmem:[#allocation11 + $0xac] sm:$0xf]
        %v1503 = vld [vmem:[#allocation11 + $0xb0] sm:$0xf]
        %v1504 = vld [vmem:[#allocation11 + $0xb4] sm:$0xf]
        %v1505 = vld [vmem:[#allocation11 + $0xb8] sm:$0xf]
        %v1506 = vld [vmem:[#allocation11 + $0xbc] sm:$0xf]
        %v1507 = vld [vmem:[#allocation2] sm:$0x1]
        %v1509 = vperm.slane %v1507, 0
        %1510 = vset.pattern.permute.xlu0 0
        %1511 = vperm.xlu0 %1510, %v1509
        %v1512 = vpop.permute.xlu0 %1511
        %v1562 = vunpack.c.l.b16 %v1459
        %v1563 = vunpack.c.l.b16 %v1460
        %v1564 = vunpack.c.l.b16 %v1461
        %v1565 = vunpack.c.l.b16 %v1462
        %v1566 = vunpack.c.l.b16 %v1463
        %v1567 = vunpack.c.l.b16 %v1464
        %v1568 = vunpack.c.l.b16 %v1465
        %v1569 = vunpack.c.l.b16 %v1466
        %v1570 = vunpack.c.l.b16 %v1467
        %v1571 = vunpack.c.l.b16 %v1468
        %v1572 = vunpack.c.l.b16 %v1469
        %v1573 = vunpack.c.l.b16 %v1470
        %v1574 = vunpack.c.l.b16 %v1471
        %v1575 = vunpack.c.l.b16 %v1472
        %v1576 = vunpack.c.l.b16 %v1473
        %v1577 = vunpack.c.l.b16 %v1474
        %v1578 = vunpack.c.l.b16 %v1475
        %v1579 = vunpack.c.l.b16 %v1476
        %v1580 = vunpack.c.l.b16 %v1477
        %v1581 = vunpack.c.l.b16 %v1478
        %v1582 = vunpack.c.l.b16 %v1479
        %v1583 = vunpack.c.l.b16 %v1480
        %v1584 = vunpack.c.l.b16 %v1481
        %v1585 = vunpack.c.l.b16 %v1482
        %v1586 = vunpack.c.l.b16 %v1483
        %v1587 = vunpack.c.l.b16 %v1484
        %v1588 = vunpack.c.l.b16 %v1485
        %v1589 = vunpack.c.l.b16 %v1486
        %v1590 = vunpack.c.l.b16 %v1487
        %v1591 = vunpack.c.l.b16 %v1488
        %v1592 = vunpack.c.l.b16 %v1489
        %v1593 = vunpack.c.l.b16 %v1490
        %v1594 = vunpack.c.l.b16 %v1491
        %v1595 = vunpack.c.l.b16 %v1492
        %v1596 = vunpack.c.l.b16 %v1493
        %v1597 = vunpack.c.l.b16 %v1494
        %v1598 = vunpack.c.l.b16 %v1495
        %v1599 = vunpack.c.l.b16 %v1496
        %v1600 = vunpack.c.l.b16 %v1497
        %v1601 = vunpack.c.l.b16 %v1498
        %v1602 = vunpack.c.l.b16 %v1499
        %v1603 = vunpack.c.l.b16 %v1500
        %v1604 = vunpack.c.l.b16 %v1501
        %v1605 = vunpack.c.l.b16 %v1502
        %v1606 = vunpack.c.l.b16 %v1503
        %v1607 = vunpack.c.l.b16 %v1504
        %v1608 = vunpack.c.l.b16 %v1505
        %v1609 = vunpack.c.l.b16 %v1506
        %v1610 = vpack.c.b16 %v1563, %v1562
        %v1611 = vpack.c.b16 %v1565, %v1564
        %v1612 = vpack.c.b16 %v1567, %v1566
        %v1613 = vpack.c.b16 %v1569, %v1568
        %v1614 = vpack.c.b16 %v1571, %v1570
        %v1615 = vpack.c.b16 %v1573, %v1572
        %v1616 = vpack.c.b16 %v1575, %v1574
        %v1617 = vpack.c.b16 %v1577, %v1576
        %v1618 = vpack.c.b16 %v1579, %v1578
        %v1619 = vpack.c.b16 %v1581, %v1580
        %v1620 = vpack.c.b16 %v1583, %v1582
        %v1621 = vpack.c.b16 %v1585, %v1584
        %v1622 = vpack.c.b16 %v1587, %v1586
        %v1623 = vpack.c.b16 %v1589, %v1588
        %v1624 = vpack.c.b16 %v1591, %v1590
        %v1625 = vpack.c.b16 %v1593, %v1592
        %v1626 = vpack.c.b16 %v1595, %v1594
        %v1627 = vpack.c.b16 %v1597, %v1596
        %v1628 = vpack.c.b16 %v1599, %v1598
        %v1629 = vpack.c.b16 %v1601, %v1600
        %v1630 = vpack.c.b16 %v1603, %v1602
        %v1631 = vpack.c.b16 %v1605, %v1604
        %v1632 = vpack.c.b16 %v1607, %v1606
        %v1633 = vpack.c.b16 %v1609, %v1608
        %1658 = vmatpush.bf16.msra.mxu0 %v1617
        %1659 = vmatpush.bf16.msra.mxu0 %v1616
        %1660 = vmatpush.bf16.msra.mxu0 %v1615
        %1661 = vmatpush.bf16.msra.mxu0 %v1614
        %1662 = vmatpush.bf16.msra.mxu0 %v1613
        %1663 = vmatpush.bf16.msra.mxu0 %v1612
        %1664 = vmatpush.bf16.msra.mxu0 %v1611
        %1665 = vmatpush.bf16.msra.mxu0 %v1610
        %1666 = vmatmul.bf16.gmra.mxu0 %v1456
        %v1667 = vpop.f32.mrf.mxu0
        %v1668 = vadd.f32 %v1512, %v1667
        %v1669 = vpop.f32.mrf.mxu0
        %1670 = vdwg.mxu0
        %1671 = vmatpush.bf16.msra.mxu0 %v1625
        %1672 = vmatpush.bf16.msra.mxu0 %v1624
        %1673 = vmatpush.bf16.msra.mxu0 %v1623
        %1674 = vmatpush.bf16.msra.mxu0 %v1622
        %1675 = vmatpush.bf16.msra.mxu0 %v1621
        %1676 = vmatpush.bf16.msra.mxu0 %v1620
        %1677 = vmatpush.bf16.msra.mxu0 %v1619
        %1678 = vmatpush.bf16.msra.mxu0 %v1618
        %1679 = vmatmul.bf16.gmra.mxu0 %v1457
        %v1680 = vpop.f32.mrf.mxu0
        %v1681 = vadd.f32 %v1668, %v1680
        %v1682 = vpop.f32.mrf.mxu0
        %1683 = vdwg.mxu0
        %1684 = vmatpush.bf16.msra.mxu0 %v1633
        %1685 = vmatpush.bf16.msra.mxu0 %v1632
        %1686 = vmatpush.bf16.msra.mxu0 %v1631
        %1687 = vmatpush.bf16.msra.mxu0 %v1630
        %1688 = vmatpush.bf16.msra.mxu0 %v1629
        %1689 = vmatpush.bf16.msra.mxu0 %v1628
        %1690 = vmatpush.bf16.msra.mxu0 %v1627
        %1691 = vmatpush.bf16.msra.mxu0 %v1626
        %1692 = vmatmul.bf16.gmra.mxu0 %v1458
        %v1693 = vpop.f32.mrf.mxu0
        %v1694 = vadd.f32 %v1681, %v1693
        %v1695 = vpop.f32.mrf.mxu0
        %1696 = vdwg.mxu0
        %1697 = vst [vmem:[%s361] sm:$0xff] %v1694
        %s1698 = sand.u32 %s188, 1
        %s1699 = scalar_lea.sflag [#allocation5], %s1698
        %s1700 = sand.u32 %s188, 1
        %s1701 = smul.addr %s1700, 8
        %s1702 = scalar_lea.vmem [#allocation12], %s1701
        // Predicated region
        $region69: #{tpu_custom_call.1} parent=47 // pred_check
          %p1703 = pneg %p198
        $region70: #{tpu_custom_call.1} parent=47 // pred_check_branch
          %1705 = sbr.rel (%p1703) target = $region72
        $region71: #{tpu_custom_call.1} parent=47 // pred_region
          %1707 = vsyncadd %s1699, 0
          %s1708 = smul.addr %s28, 8
          %s1709 = scalar_lea.hbm %s7, %s1708
          %s1711 = sshll.u32 %s1702, 4
          %s1712 = int_to_ptr.vmem [resolvable:$true] %s1711
          %s1713 = sshll.u32 %s1709, 4
          %s1714 = int_to_ptr.hbm [resolvable:$true] %s1713
          %1716 = dma.vmem_to_hbm [thread:$0]  %s1712, 128, %s1714, %s1699
        $region72: #{tpu_custom_call.1} parent=47 // pred_fallthru
          _
      $region48: #{tpu_custom_call.1} parent=5 // pred_fallthru
        _
      %p1717 = scmp.le.s32.totalorder 2, %s23
      // Predicated region
      $region73: #{tpu_custom_call.1} parent=5 // pred_check
        %p1718 = pneg %p1717
      $region74: #{tpu_custom_call.1} parent=5 // pred_check_branch
        %1720 = sbr.rel (%p1718) target = $region76
      $region75: #{tpu_custom_call.1} parent=5 // pred_region
        %s1721 = ssub.s32 %s23, 2
        // Predicated region
        $region77: #{tpu_custom_call.1} parent=75 // pred_check
          %p1722 = pneg %p204
        $region78: #{tpu_custom_call.1} parent=75 // pred_check_branch
          %1724 = sbr.rel (%p1722) target = $region80
        $region79: #{tpu_custom_call.1} parent=75 // pred_region
          %s1725 = sand.u32 %s189, 1
          %s1726 = scalar_lea.sflag [#allocation5], %s1725
          %s1727 = sand.u32 %s189, 1
          %s1728 = smul.addr %s1727, 8
          %s1729 = scalar_lea.vmem [#allocation12], %s1728
          %1731 = dma.done %s1726, 128
        $region80: #{tpu_custom_call.1} parent=75 // pred_fallthru
          _
      $region76: #{tpu_custom_call.1} parent=5 // pred_fallthru
        _
    $region6: #{tpu_custom_call.1} parent=1 // loop_footer
      %s27 = sadd.s32 1, %s23
    $region7: #{tpu_custom_call.1} parent=1 // loop_footer_branch
      %22 = sbr.rel target = $region3
    $region8: #{tpu_custom_call.1} parent=1 // loop_exit
      _
    %1732 = vsyncpa [#allocation4], 1
    %s1733 = scalar_lea.sflag [#allocation4], 1
    %1734 = vsyncpa %s1733, 1
    %1735 = vsyncpa [#allocation7], 1
    %1736 = vsyncpa [#allocation10], 1
    %1737 = vsyncpa [#allocation5], 1
    %s1738 = scalar_lea.sflag [#allocation5], 1
    %1739 = vsyncpa %s1738, 1

</llo_original>
